<compile_context>
chip_gen: v5e
topology: v5e:2x2
jax: 0.10.0
libtpu: 0.0.40
codegen_flags: <defaults>
</compile_context>

<pallas_src>
import jax
import jax.numpy as jnp
from jax.experimental import pallas as pl
from jax.experimental.pallas import tpu as pltpu

ALPHA = -0.5
BETA = -0.5
POLY_DEGREE = 2
NUM_OBJECTS = 16
BN_EPS = 1e-5

# bf16 MXU operands (f32 accumulate) and a bf16 tanh(x4) HBM intermediate are
# the production choice on v5e/v6e/v7x (3-4x MXU throughput, half the HBM
# round-trip).  Element-wise / transcendental math stays in f32 (v5e has no
# bf16 VPU/EUP path).  Validate KAN accuracy vs. the fp32 reference before
# shipping -- tanh saturation + the polynomial basis amplify operand error.
MXU_OPERAND_DTYPE = jnp.bfloat16
ACT_DTYPE = jnp.bfloat16


# ----------------------------------------------------------------------------
# Jacobi polynomial helpers (host-side recurrence / monomial re-basing)
# ----------------------------------------------------------------------------
def _jacobi_recurrence(degree, a, b):
    rec = []
    for i in range(2, degree + 1):
        A = (2 * i + a + b - 1) * (2 * i + a + b) / (2 * i * (i + a + b))
        B = (2 * i + a + b - 1) * (a ** 2 - b ** 2) / (
            2 * i * (i + a + b) * (2 * i + a + b - 2))
        C = -2 * (i + a - 1) * (i + b - 1) * (2 * i + a + b) / (
            2 * i * (i + a + b) * (2 * i + a + b - 2))
        rec.append((A, B, C))
    return tuple(rec)


def _jacobi_basis_list(x, degree, rec, a, b):
    """P_0..P_degree evaluated at tanh(x); returns a list of arrays like x."""
    t = jnp.tanh(x)
    ps = [jnp.ones_like(t)]
    if degree > 0:
        ps.append(0.5 * (a - b + (a + b + 2.0) * t))
    for (A, B, C) in rec:
        ps.append((A * t + B) * ps[-1] + C * ps[-2])
    return ps


def _jacobi_monomial_matrix(degree, a, b):
    """M[d][m]: coefficient of t^m in P_d^{(a,b)}(t).  Shape (D+1, D+1)."""
    M = [[0.0] * (degree + 1) for _ in range(degree + 1)]
    M[0][0] = 1.0
    if degree > 0:
        M[1][0] = 0.5 * (a - b)
        M[1][1] = 0.5 * (a + b + 2.0)
    for i, (A, B, C) in enumerate(_jacobi_recurrence(degree, a, b), start=2):
        for m in range(degree + 1):
            v = B * M[i - 1][m] + C * M[i - 2][m]
            if m > 0:
                v += A * M[i - 1][m - 1]
            M[i][m] = v
    return M


def _monomial_basis(t, degree):
    """[t, t^2, ..., t^D] stacked along the (sublane) channel axis."""
    ps = [t]
    for _ in range(1, degree):
        ps.append(ps[-1] * t)
    return jnp.concatenate(ps, axis=0) if degree > 1 else t


# ----------------------------------------------------------------------------
# Kernel A: jacobikan4 + bn4 -> tanh -> jacobikan5 + bn5 -> fused global max
# ----------------------------------------------------------------------------
def _make_fused_l45_kernel(degree, mxu_dtype):
    def kernel(x_ref, w4_ref, b4_ref, w5_ref, b5_ref, t4_ref, gmax_ref):
        # x_ref:  (1, C_in_pad, TN)     w4_ref: (C4, D*C_in_pad) bf16   b4: (C4, 1)
        # w5_ref: (C5, D*C4) bf16       b5_ref: (C5, 1)
        # t4_ref: (1, C4, TN) bf16      gmax_ref: (1, C5, 1) f32 (revisited over nn)
        x = x_ref[0].astype(jnp.float32)
        t = jnp.tanh(x)

        # --- layer 4: one MXU matmul over stacked monomials [t, t^2, ...] ----
        z4 = jnp.dot(w4_ref[...], _monomial_basis(t, degree).astype(mxu_dtype),
                     preferred_element_type=jnp.float32) + b4_ref[...]
        t4 = jnp.tanh(z4)                       # exactly what layers 5 & 9 consume
        t4_ref[0] = t4.astype(t4_ref.dtype)     # bf16 intermediate -> HBM

        # --- layer 5 (stays entirely in VMEM) ---------------------------------
        z5 = jnp.dot(w5_ref[...], _monomial_basis(t4, degree).astype(mxu_dtype),
                     preferred_element_type=jnp.float32) + b5_ref[...]

        # --- fused global max-pool: accumulate across point tiles -------------
        tile_max = jnp.max(z5, axis=-1, keepdims=True)          # (C5, 1)
        first = pl.program_id(2) == 0

        @pl.when(first)
        def _():
            gmax_ref[0] = tile_max              # direct write: no -inf fill pass

        @pl.when(jnp.logical_not(first))
        def _():
            gmax_ref[0] = jnp.maximum(gmax_ref[0], tile_max)

    return kernel


def fused_layers_4_5_maxpool(x, w4, b4, w5, b5, *, tile_n):
    B, C_in, N = x.shape
    C4 = b4.shape[0]
    C5 = b5.shape[0]
    assert N % tile_n == 0, (N, tile_n)
    n_tiles = N // tile_n
    # v7x has 2 TensorCores; the point-tile axis is forced "arbitrary" by the
    # max accumulator, so split it into 2 parallel super-chunks with partial
    # maxes (finished in the glue) so batch==1 still uses both cores.
    num_super = 2 if (n_tiles % 2 == 0 and n_tiles >= 2) else 1
    tps = n_tiles // num_super

    kernel = _make_fused_l45_kernel(POLY_DEGREE, MXU_OPERAND_DTYPE)
    t4, gmax = pl.pallas_call(
        kernel,
        out_shape=(jax.ShapeDtypeStruct((B, C4, N), ACT_DTYPE),
                   jax.ShapeDtypeStruct((B * num_super, C5, 1), jnp.float32)),
        grid_spec=pltpu.PrefetchScalarGridSpec(
            num_scalar_prefetch=0,
            grid=(B, num_super, tps),
            in_specs=[
                pl.BlockSpec((1, C_in, tile_n),
                             lambda bb, cc, nn: (bb, 0, cc * tps + nn)),
                pl.BlockSpec(w4.shape, lambda bb, cc, nn: (0, 0)),
                pl.BlockSpec((C4, 1), lambda bb, cc, nn: (0, 0)),
                pl.BlockSpec(w5.shape, lambda bb, cc, nn: (0, 0)),
                pl.BlockSpec((C5, 1), lambda bb, cc, nn: (0, 0)),
            ],
            out_specs=(
                pl.BlockSpec((1, C4, tile_n),
                             lambda bb, cc, nn: (bb, 0, cc * tps + nn)),
                pl.BlockSpec((1, C5, 1),
                             lambda bb, cc, nn: (bb * num_super + cc, 0, 0)),
            ),
        ),
        compiler_params=pltpu.CompilerParams(
            # gmax is an accumulator over the last axis only -> "arbitrary".
            dimension_semantics=("parallel", "parallel", "arbitrary")),
    )(x, w4, b4, w5, b5)
    return t4, gmax.reshape(B, num_super, C5)


# ----------------------------------------------------------------------------
# Kernel B: jacobikan9 + bn9 (+ per-batch bias for global/class channels)
#           -> jacobikan10
# ----------------------------------------------------------------------------
def _make_fused_l910_kernel(degree, mxu_dtype):
    def kernel(t4_ref, w9_ref, b9_ref, w10_ref, b10_ref, o_ref):
        # t4_ref: (1, C4, TN) bf16 (already tanh'ed in kernel A)
        # w9_ref: (C4, D*C4) bf16      b9_ref: (1, C4, 1)  per-batch bias
        # w10_ref: (C_out_pad, D*C4) bf16   b10_ref: (C_out_pad, 1)
        t4 = t4_ref[0].astype(jnp.float32)

        # --- layer 9: only the per-point local_4 channels are contracted ------
        z9 = jnp.dot(w9_ref[...], _monomial_basis(t4, degree).astype(mxu_dtype),
                     preferred_element_type=jnp.float32) + b9_ref[0]

        # --- layer 10 (constant-term bias only, no BatchNorm) ------------------
        t9 = jnp.tanh(z9)
        out = jnp.dot(w10_ref[...], _monomial_basis(t9, degree).astype(mxu_dtype),
                      preferred_element_type=jnp.float32) + b10_ref[...]
        o_ref[0] = out.astype(o_ref.dtype)

    return kernel


def fused_layers_9_10(t4, w9, b9_b, w10, b10, *, tile_n):
    B, C4, N = t4.shape
    C_out_pad = w10.shape[0]
    assert N % tile_n == 0, (N, tile_n)
    n_tiles = N // tile_n
    kernel = _make_fused_l910_kernel(POLY_DEGREE, MXU_OPERAND_DTYPE)
    return pl.pallas_call(
        kernel,
        out_shape=jax.ShapeDtypeStruct((B, C_out_pad, N), jnp.float32),
        grid_spec=pltpu.PrefetchScalarGridSpec(
            num_scalar_prefetch=0,
            grid=(B, n_tiles),
            in_specs=[
                pl.BlockSpec((1, C4, tile_n), lambda bb, nn: (bb, 0, nn)),
                pl.BlockSpec(w9.shape, lambda bb, nn: (0, 0)),
                pl.BlockSpec((1, C4, 1), lambda bb, nn: (bb, 0, 0)),
                pl.BlockSpec(w10.shape, lambda bb, nn: (0, 0)),
                pl.BlockSpec((C_out_pad, 1), lambda bb, nn: (0, 0)),
            ],
            out_specs=pl.BlockSpec((1, C_out_pad, tile_n),
                                   lambda bb, nn: (bb, 0, nn)),
        ),
        compiler_params=pltpu.CompilerParams(
            dimension_semantics=("parallel", "parallel")),
    )(t4, w9, b9_b, w10, b10)


# ----------------------------------------------------------------------------
# Host-side parameter prep: monomial rebase, fold BN scale/shift + P_0 terms,
# pad channels, pre-cast weights to bf16.
# ----------------------------------------------------------------------------
def _prepare_layer(w_iod, scale=None, shift=None, *, pad_in=0, pad_out=0,
                   w_dtype=MXU_OPERAND_DTYPE):
    """(C_in, C_out, D+1) Jacobi coeffs -> (stacked monomial weight, bias).

    Weight shape (C_out+pad_out, D*(C_in+pad_in)), column index (m-1)*C_in_pad+i
    for monomial t^m (m = 1..D); the constant (t^0) contributions and the BN
    shift collapse into the per-channel bias, the BN scale is folded into rows.
    """
    C_in, C_out, Dp1 = w_iod.shape
    D = Dp1 - 1
    M = jnp.asarray(_jacobi_monomial_matrix(D, ALPHA, BETA), jnp.float32)
    w_mono = jnp.einsum("iod,dm->iom", w_iod.astype(jnp.float32), M)
    if scale is None:
        scale = jnp.ones((C_out,), jnp.float32)
    if shift is None:
        shift = jnp.zeros((C_out,), jnp.float32)
    bias = shift + scale * jnp.sum(w_mono[:, :, 0], axis=0)        # (C_out,)
    w_m = w_mono[:, :, 1:]                                         # (C_in, C_out, D)
    if pad_in:
        w_m = jnp.pad(w_m, ((0, pad_in), (0, 0), (0, 0)))
    c_in_p = C_in + pad_in
    w = jnp.transpose(w_m, (2, 0, 1)).reshape(D * c_in_p, C_out).T * scale[:, None]
    if pad_out:
        w = jnp.pad(w, ((0, pad_out), (0, 0)))
        bias = jnp.pad(bias, ((0, pad_out),))
    return w.astype(w_dtype), bias.reshape(-1, 1).astype(jnp.float32)


def _stack_weight_full(w_iod, scale=None):
    """Full (D+1)-block stacking (Jacobi basis) for the tiny plain-JAX glue."""
    C_in, C_out, Dp1 = w_iod.shape
    w = jnp.transpose(w_iod.astype(jnp.float32), (2, 0, 1)).reshape(Dp1 * C_in, C_out).T
    if scale is not None:
        w = w * scale[:, None]
    return w


def _fold_params(params, c_in_pad, c_out_pad):
    C4 = params["bn4_scale"].shape[0]
    w4, b4 = _prepare_layer(params["w4"], params["bn4_scale"],
                            params["bn4_shift"], pad_in=c_in_pad)
    w5, b5 = _prepare_layer(params["w5"], params["bn5_scale"], params["bn5_shift"])
    # layer-9 split: rows [:C4] see the per-point local_4 channels, rows [C4:]
    # see the point-invariant (global max-pool + class label) channels.
    w9l, b9l = _prepare_layer(params["w9"][:C4], params["bn9_scale"],
                              params["bn9_shift"])
    w9_gc = _stack_weight_full(params["w9"][C4:], params["bn9_scale"])
    w10, b10 = _prepare_layer(params["w10"], pad_out=c_out_pad)
    return {"w4": w4, "b4": b4, "w5": w5, "b5": b5,
            "w9_local": w9l, "b9_local": b9l, "w9_gc": w9_gc,
            "w10": w10, "b10": b10}


# ----------------------------------------------------------------------------
# Tiling choice: biggest 128-aligned point tile that fits comfortably in VMEM
# ----------------------------------------------------------------------------
def _choose_tile_n(N, B, c4, c5, c_out_pad):
    c_in_pad = 8
    per_point_a = 4 * (c5 + (POLY_DEGREE + 2) * c4 + (POLY_DEGREE + 3) * c_in_pad)
    per_point_b = 4 * ((POLY_DEGREE + 2) * c4 + 2 * c_out_pad)
    per_point = max(per_point_a, per_point_b, 1)
    budget = 12 << 20        # comfortable under the 32 MiB scoped-VMEM default
    cap = min(2048, max(128, (budget // per_point) // 128 * 128))
    if B == 1:
        # keep >=2 point tiles so kernel A's parallel super-chunk axis can use
        # both v7x TensorCores even at batch 1.
        cap = min(cap, max(128, ((N // 2) // 128) * 128))
    best = None
    t = 128
    lim = min(N, cap)
    while t <= lim:
        if N % t == 0:
            best = t
        t += 128
    return best if best is not None else N


# ----------------------------------------------------------------------------
# PointNetKAN forward
# ----------------------------------------------------------------------------
def pointnet_kan_forward(params, x, class_label, *, tile_n=None):
    B, C_in, N = x.shape
    C4 = params["bn4_scale"].shape[0]
    C5 = params["bn5_scale"].shape[0]
    C_out = params["w10"].shape[1]
    c_in_pad = (-C_in) % 8
    c_out_pad = (-C_out) % 8
    tn = (_choose_tile_n(N, B, C4, C5, C_out + c_out_pad)
          if tile_n is None else tile_n)

    # Pad the tiny input-channel dim to a multiple of 8 so in-kernel sublane
    # concatenation of the monomial basis stays (8,128)-tile aligned.
    if c_in_pad:
        x = jnp.pad(x, ((0, 0), (0, c_in_pad), (0, 0)))

    p = _fold_params(params, c_in_pad, c_out_pad)
    assert C4 % 8 == 0 and C5 % 8 == 0, (C4, C5)

    # --- kernel A: jacobikan4+bn4 -> tanh -> HBM ; jacobikan5+bn5 -> max ------
    t4, gmax = fused_layers_4_5_maxpool(
        x, p["w4"], p["b4"], p["w5"], p["b5"], tile_n=tn)

    # --- tiny glue: point-invariant layer-9 contribution (per batch) ----------
    # global_feature and the class one-hot are constant over points, so their
    # Jacobi-basis contribution to layer 9 collapses to a (B, C4) bias; the
    # (B, C4+C5+16, N) broadcast/concat of the reference is never materialized.
    gfeat = jnp.max(gmax, axis=1)                                     # (B, C5)
    rec = _jacobi_recurrence(POLY_DEGREE, ALPHA, BETA)
    g = jnp.concatenate([gfeat, class_label.astype(jnp.float32)], axis=1)
    basis_g = jnp.concatenate(
        _jacobi_basis_list(g, POLY_DEGREE, rec, ALPHA, BETA), axis=1)
    bias9_gc = jnp.einsum("bk,ok->bo", basis_g, p["w9_gc"])           # (B, C4)
    b9_b = (bias9_gc + p["b9_local"][None, :, 0])[:, :, None]         # (B, C4, 1)

    # --- kernel B: jacobikan9+bn9 -> jacobikan10 -------------------------------
    out = fused_layers_9_10(t4, p["w9_local"], b9_b, p["w10"], p["b10"], tile_n=tn)
    return out[:, :C_out, :]


# ----------------------------------------------------------------------------
# Deterministic parameter init (matches nn.init.normal_(std=1/(in*(deg+1))))
# ----------------------------------------------------------------------------
def init_params(key, input_channels, output_channels, scaling):
    c4 = int(128 * scaling)
    c5 = int(1024 * scaling)
    c9_in = c5 + c4 + NUM_OBJECTS

    def coeffs(k, c_in, c_out):
        std = 1.0 / (c_in * (POLY_DEGREE + 1))
        return std * jax.random.normal(k, (c_in, c_out, POLY_DEGREE + 1),
                                       jnp.float32)

    def bn(c):
        # PyTorch eval-mode defaults: gamma=1, beta=0, mean=0, var=1
        gamma = jnp.ones((c,), jnp.float32)
        beta = jnp.zeros((c,), jnp.float32)
        mean = jnp.zeros((c,), jnp.float32)
        var = jnp.ones((c,), jnp.float32)
        scale = gamma / jnp.sqrt(var + BN_EPS)
        shift = beta - mean * scale
        return scale, shift

    k4, k5, k9, k10 = jax.random.split(key, 4)
    bn4 = bn(c4)
    bn5 = bn(c5)
    bn9 = bn(c4)
    return {
        "w4": coeffs(k4, input_channels, c4),
        "w5": coeffs(k5, c4, c5),
        "w9": coeffs(k9, c9_in, c4),
        "w10": coeffs(k10, c4, output_channels),
        "bn4_scale": bn4[0], "bn4_shift": bn4[1],
        "bn5_scale": bn5[0], "bn5_shift": bn5[1],
        "bn9_scale": bn9[0], "bn9_shift": bn9[1],
    }


if __name__ == "__main__":
    # Small shapes consistent with the module structure.
    B = 2
    N = 512                 # num_points (lane-aligned)
    INPUT_CHANNELS = 3
    OUTPUT_CHANNELS = 50
    SCALING = 0.25          # 128*0.25 = 32, 1024*0.25 = 256 hidden channels

    key = jax.random.PRNGKey(0)
    kp, kx, kc = jax.random.split(key, 3)

    params = init_params(kp, INPUT_CHANNELS, OUTPUT_CHANNELS, SCALING)

    x = jax.random.normal(kx, (B, INPUT_CHANNELS, N), jnp.float32)
    labels = jax.random.randint(kc, (B,), 0, NUM_OBJECTS)
    class_label = jax.nn.one_hot(labels, NUM_OBJECTS, dtype=jnp.float32)

    fwd = jax.jit(pointnet_kan_forward, static_argnames=("tile_n",))

    # 1) Auto tile (large, single point tile per grid step at these shapes).
    out = jax.block_until_ready(fwd(params, x, class_label))
    assert out.shape == (B, OUTPUT_CHANNELS, N), out.shape

    # 2) Small explicit tile: exercises the multi-tile max accumulation and the
    #    2-super-chunk parallel split; results must match the single-tile run.
    out_small = jax.block_until_ready(fwd(params, x, class_label, tile_n=128))
    assert out_small.shape == (B, OUTPUT_CHANNELS, N), out_small.shape
    assert bool(jnp.all(jnp.isfinite(out))) and bool(jnp.all(jnp.isfinite(out_small)))
    assert jnp.allclose(out, out_small, rtol=1e-2, atol=1e-3), (
        float(jnp.max(jnp.abs(out - out_small))))

    print("KERNEL_OK")
</pallas_src>

<mosaic_0001>
module attributes {stable_mosaic.version = 11 : i64} {
  func.func @kernel(%arg0: i32, %arg1: i32, %arg2: i32, %arg3: memref<1x8x512xf32, #tpu.memory_space<vmem>>, %arg4: memref<32x16xbf16, #tpu.memory_space<vmem>>, %arg5: memref<32x1xf32, #tpu.memory_space<vmem>>, %arg6: memref<256x64xbf16, #tpu.memory_space<vmem>>, %arg7: memref<256x1xf32, #tpu.memory_space<vmem>>, %arg8: memref<1x32x512xbf16, #tpu.memory_space<vmem>>, %arg9: memref<1x256x1xf32, #tpu.memory_space<vmem>>) attributes {dimension_semantics = [#tpu.dimension_semantics<parallel>, #tpu.dimension_semantics<parallel>, #tpu.dimension_semantics<arbitrary>], iteration_bounds = array<i64: 2, 1, 1>, scalar_prefetch = 0 : i64, scratch_operands = 0 : i64, tpu.core_type = #tpu.core_type<tc>, window_params = [{transform_indices = @transform_0, window_bounds = array<i64: 1, 8, 512>}, {pipeline_mode = #tpu.pipeline_mode<synchronous>, transform_indices = @transform_1, window_bounds = array<i64: 32, 16>}, {pipeline_mode = #tpu.pipeline_mode<synchronous>, transform_indices = @transform_2, window_bounds = array<i64: 32, 1>}, {pipeline_mode = #tpu.pipeline_mode<synchronous>, transform_indices = @transform_3, window_bounds = array<i64: 256, 64>}, {pipeline_mode = #tpu.pipeline_mode<synchronous>, transform_indices = @transform_4, window_bounds = array<i64: 256, 1>}, {transform_indices = @transform_5, window_bounds = array<i64: 1, 32, 512>}, {transform_indices = @transform_6, window_bounds = array<i64: 1, 256, 1>}]} {
    %c0 = arith.constant 0 : index
    %c0_0 = arith.constant 0 : index
    %c0_1 = arith.constant 0 : index
    %0 = vector.load %arg3[%c0, %c0_0, %c0_1] : memref<1x8x512xf32, #tpu.memory_space<vmem>>, vector<1x8x512xf32>
    %1 = vector.shape_cast %0 : vector<1x8x512xf32> to vector<8x512xf32>
    %2 = math.tanh %1 : vector<8x512xf32>
    %c0_2 = arith.constant 0 : index
    %c0_3 = arith.constant 0 : index
    %3 = vector.load %arg4[%c0_2, %c0_3] : memref<32x16xbf16, #tpu.memory_space<vmem>>, vector<32x16xbf16>
    %4 = arith.mulf %2, %2 : vector<8x512xf32>
    %5 = tpu.concatenate %2, %4 in 0 : vector<8x512xf32>, vector<8x512xf32> -> vector<16x512xf32>
    %6 = arith.truncf %5 : vector<16x512xf32> to vector<16x512xbf16>
    %cst = arith.constant dense<0.000000e+00> : vector<32x512xf32>
    %7 = tpu.matmul %3, %6, %cst {dimension_numbers = #tpu.dot_dimension_numbers<[1], [0], [0], [1], [0, 0, 1, 1], [], []>} : vector<32x16xbf16>, vector<16x512xbf16>, vector<32x512xf32> -> vector<32x512xf32>
    %c0_4 = arith.constant 0 : index
    %c0_5 = arith.constant 0 : index
    %8 = vector.load %arg5[%c0_4, %c0_5] : memref<32x1xf32, #tpu.memory_space<vmem>>, vector<32x1xf32>
    %9 = vector.broadcast %8 : vector<32x1xf32> to vector<32x512xf32>
    %10 = arith.addf %7, %9 : vector<32x512xf32>
    %11 = math.tanh %10 : vector<32x512xf32>
    %12 = arith.truncf %11 : vector<32x512xf32> to vector<32x512xbf16>
    %c0_6 = arith.constant 0 : index
    %c0_7 = arith.constant 0 : index
    %c0_8 = arith.constant 0 : index
    %13 = vector.load %arg8[%c0_6, %c0_7, %c0_8] : memref<1x32x512xbf16, #tpu.memory_space<vmem>>, vector<1x32x512xbf16>
    %14 = vector.shape_cast %13 : vector<1x32x512xbf16> to vector<32x512xbf16>
    %15 = vector.shape_cast %12 : vector<32x512xbf16> to vector<1x32x512xbf16>
    tpu.vector_store %arg8[%c0_6, %c0_7, %c0_8], %15 {strides = array<i32>} : memref<1x32x512xbf16, #tpu.memory_space<vmem>>, vector<1x32x512xbf16>,
    %c0_9 = arith.constant 0 : index
    %c0_10 = arith.constant 0 : index
    %16 = vector.load %arg6[%c0_9, %c0_10] : memref<256x64xbf16, #tpu.memory_space<vmem>>, vector<256x64xbf16>
    %17 = arith.mulf %11, %11 : vector<32x512xf32>
    %18 = tpu.concatenate %11, %17 in 0 : vector<32x512xf32>, vector<32x512xf32> -> vector<64x512xf32>
    %19 = arith.truncf %18 : vector<64x512xf32> to vector<64x512xbf16>
    %cst_11 = arith.constant dense<0.000000e+00> : vector<256x512xf32>
    %20 = tpu.matmul %16, %19, %cst_11 {dimension_numbers = #tpu.dot_dimension_numbers<[1], [0], [0], [1], [0, 0, 1, 1], [], []>} : vector<256x64xbf16>, vector<64x512xbf16>, vector<256x512xf32> -> vector<256x512xf32>
    %c0_12 = arith.constant 0 : index
    %c0_13 = arith.constant 0 : index
    %21 = vector.load %arg7[%c0_12, %c0_13] : memref<256x1xf32, #tpu.memory_space<vmem>>, vector<256x1xf32>
    %22 = vector.broadcast %21 : vector<256x1xf32> to vector<256x512xf32>
    %23 = arith.addf %20, %22 : vector<256x512xf32>
    %cst_14 = arith.constant dense<0xFF800000> : vector<256xf32>
    %24 = vector.multi_reduction <maximumf>, %23, %cst_14 [1] : vector<256x512xf32> to vector<256xf32>
    %25 = vector.shape_cast %24 : vector<256xf32> to vector<256x1xf32>
    %c0_i32 = arith.constant 0 : i32
    %26 = arith.cmpi eq, %arg2, %c0_i32 : i32
    %27 = arith.extui %26 : i1 to i32
    %c0_i32_15 = arith.constant 0 : i32
    %28 = arith.cmpi ne, %27, %c0_i32_15 : i32
    scf.if %28 {
      %c0_17 = arith.constant 0 : index
      %c0_18 = arith.constant 0 : index
      %c0_19 = arith.constant 0 : index
      %32 = vector.load %arg9[%c0_17, %c0_18, %c0_19] : memref<1x256x1xf32, #tpu.memory_space<vmem>>, vector<1x256x1xf32>
      %33 = vector.shape_cast %32 : vector<1x256x1xf32> to vector<256x1xf32>
      %34 = vector.shape_cast %25 : vector<256x1xf32> to vector<1x256x1xf32>
      tpu.vector_store %arg9[%c0_17, %c0_18, %c0_19], %34 {strides = array<i32>} : memref<1x256x1xf32, #tpu.memory_space<vmem>>, vector<1x256x1xf32>,
    } else {
    }
    %true = arith.constant true
    %29 = arith.xori %26, %true : i1
    %30 = arith.extui %29 : i1 to i32
    %c0_i32_16 = arith.constant 0 : i32
    %31 = arith.cmpi ne, %30, %c0_i32_16 : i32
    scf.if %31 {
      %c0_17 = arith.constant 0 : index
      %c0_18 = arith.constant 0 : index
      %c0_19 = arith.constant 0 : index
      %32 = vector.load %arg9[%c0_17, %c0_18, %c0_19] : memref<1x256x1xf32, #tpu.memory_space<vmem>>, vector<1x256x1xf32>
      %33 = vector.shape_cast %32 : vector<1x256x1xf32> to vector<256x1xf32>
      %34 = arith.maximumf %33, %25 : vector<256x1xf32>
      %c0_20 = arith.constant 0 : index
      %c0_21 = arith.constant 0 : index
      %c0_22 = arith.constant 0 : index
      %35 = vector.load %arg9[%c0_20, %c0_21, %c0_22] : memref<1x256x1xf32, #tpu.memory_space<vmem>>, vector<1x256x1xf32>
      %36 = vector.shape_cast %35 : vector<1x256x1xf32> to vector<256x1xf32>
      %37 = vector.shape_cast %34 : vector<256x1xf32> to vector<1x256x1xf32>
      tpu.vector_store %arg9[%c0_20, %c0_21, %c0_22], %37 {strides = array<i32>} : memref<1x256x1xf32, #tpu.memory_space<vmem>>, vector<1x256x1xf32>,
    } else {
    }
    return
  }
  func.func @transform_0(%arg0: i32, %arg1: i32, %arg2: i32) -> (i32, i32, i32) {
    %c1_i32 = arith.constant 1 : i32
    %0 = arith.muli %arg1, %c1_i32 : i32
    %1 = arith.addi %0, %arg2 : i32
    %c0_i32 = arith.constant 0 : i32
    %c0_i32_0 = arith.constant 0 : i32
    return %arg0, %c0_i32, %1 : i32, i32, i32
  }
  func.func @transform_1(%arg0: i32, %arg1: i32, %arg2: i32) -> (i32, i32) {
    %c0_i32 = arith.constant 0 : i32
    %c0_i32_0 = arith.constant 0 : i32
    %c0_i32_1 = arith.constant 0 : i32
    return %c0_i32, %c0_i32_0 : i32, i32
  }
  func.func @transform_2(%arg0: i32, %arg1: i32, %arg2: i32) -> (i32, i32) {
    %c0_i32 = arith.constant 0 : i32
    %c0_i32_0 = arith.constant 0 : i32
    %c0_i32_1 = arith.constant 0 : i32
    return %c0_i32, %c0_i32_0 : i32, i32
  }
  func.func @transform_3(%arg0: i32, %arg1: i32, %arg2: i32) -> (i32, i32) {
    %c0_i32 = arith.constant 0 : i32
    %c0_i32_0 = arith.constant 0 : i32
    %c0_i32_1 = arith.constant 0 : i32
    return %c0_i32, %c0_i32_0 : i32, i32
  }
  func.func @transform_4(%arg0: i32, %arg1: i32, %arg2: i32) -> (i32, i32) {
    %c0_i32 = arith.constant 0 : i32
    %c0_i32_0 = arith.constant 0 : i32
    %c0_i32_1 = arith.constant 0 : i32
    return %c0_i32, %c0_i32_0 : i32, i32
  }
  func.func @transform_5(%arg0: i32, %arg1: i32, %arg2: i32) -> (i32, i32, i32) {
    %c1_i32 = arith.constant 1 : i32
    %0 = arith.muli %arg1, %c1_i32 : i32
    %1 = arith.addi %0, %arg2 : i32
    %c0_i32 = arith.constant 0 : i32
    %c0_i32_0 = arith.constant 0 : i32
    return %arg0, %c0_i32, %1 : i32, i32, i32
  }
  func.func @transform_6(%arg0: i32, %arg1: i32, %arg2: i32) -> (i32, i32, i32) {
    %c1_i32 = arith.constant 1 : i32
    %0 = arith.muli %arg0, %c1_i32 : i32
    %1 = arith.addi %0, %arg1 : i32
    %c0_i32 = arith.constant 0 : i32
    %c0_i32_0 = arith.constant 0 : i32
    %c0_i32_1 = arith.constant 0 : i32
    return %1, %c0_i32, %c0_i32_0 : i32, i32, i32
  }
}

module attributes {stable_mosaic.version = 11 : i64} {
  func.func @kernel(%arg0: i32, %arg1: i32, %arg2: memref<1x32x512xbf16, #tpu.memory_space<vmem>>, %arg3: memref<32x64xbf16, #tpu.memory_space<vmem>>, %arg4: memref<1x32x1xf32, #tpu.memory_space<vmem>>, %arg5: memref<56x64xbf16, #tpu.memory_space<vmem>>, %arg6: memref<56x1xf32, #tpu.memory_space<vmem>>, %arg7: memref<1x56x512xf32, #tpu.memory_space<vmem>>) attributes {dimension_semantics = [#tpu.dimension_semantics<parallel>, #tpu.dimension_semantics<parallel>], iteration_bounds = array<i64: 2, 1>, scalar_prefetch = 0 : i64, scratch_operands = 0 : i64, tpu.core_type = #tpu.core_type<tc>, window_params = [{transform_indices = @transform_0, window_bounds = array<i64: 1, 32, 512>}, {pipeline_mode = #tpu.pipeline_mode<synchronous>, transform_indices = @transform_1, window_bounds = array<i64: 32, 64>}, {transform_indices = @transform_2, window_bounds = array<i64: 1, 32, 1>}, {pipeline_mode = #tpu.pipeline_mode<synchronous>, transform_indices = @transform_3, window_bounds = array<i64: 56, 64>}, {pipeline_mode = #tpu.pipeline_mode<synchronous>, transform_indices = @transform_4, window_bounds = array<i64: 56, 1>}, {transform_indices = @transform_5, window_bounds = array<i64: 1, 56, 512>}]} {
    %c0 = arith.constant 0 : index
    %c0_0 = arith.constant 0 : index
    %c0_1 = arith.constant 0 : index
    %0 = vector.load %arg2[%c0, %c0_0, %c0_1] : memref<1x32x512xbf16, #tpu.memory_space<vmem>>, vector<1x32x512xbf16>
    %1 = vector.shape_cast %0 : vector<1x32x512xbf16> to vector<32x512xbf16>
    %2 = arith.extf %1 : vector<32x512xbf16> to vector<32x512xf32>
    %c0_2 = arith.constant 0 : index
    %c0_3 = arith.constant 0 : index
    %3 = vector.load %arg3[%c0_2, %c0_3] : memref<32x64xbf16, #tpu.memory_space<vmem>>, vector<32x64xbf16>
    %4 = arith.mulf %2, %2 : vector<32x512xf32>
    %5 = tpu.concatenate %2, %4 in 0 : vector<32x512xf32>, vector<32x512xf32> -> vector<64x512xf32>
    %6 = arith.truncf %5 : vector<64x512xf32> to vector<64x512xbf16>
    %cst = arith.constant dense<0.000000e+00> : vector<32x512xf32>
    %7 = tpu.matmul %3, %6, %cst {dimension_numbers = #tpu.dot_dimension_numbers<[1], [0], [0], [1], [0, 0, 1, 1], [], []>} : vector<32x64xbf16>, vector<64x512xbf16>, vector<32x512xf32> -> vector<32x512xf32>
    %c0_4 = arith.constant 0 : index
    %c0_5 = arith.constant 0 : index
    %c0_6 = arith.constant 0 : index
    %8 = vector.load %arg4[%c0_4, %c0_5, %c0_6] : memref<1x32x1xf32, #tpu.memory_space<vmem>>, vector<1x32x1xf32>
    %9 = vector.shape_cast %8 : vector<1x32x1xf32> to vector<32x1xf32>
    %10 = vector.broadcast %9 : vector<32x1xf32> to vector<32x512xf32>
    %11 = arith.addf %7, %10 : vector<32x512xf32>
    %12 = math.tanh %11 : vector<32x512xf32>
    %c0_7 = arith.constant 0 : index
    %c0_8 = arith.constant 0 : index
    %13 = vector.load %arg5[%c0_7, %c0_8] : memref<56x64xbf16, #tpu.memory_space<vmem>>, vector<56x64xbf16>
    %14 = arith.mulf %12, %12 : vector<32x512xf32>
    %15 = tpu.concatenate %12, %14 in 0 : vector<32x512xf32>, vector<32x512xf32> -> vector<64x512xf32>
    %16 = arith.truncf %15 : vector<64x512xf32> to vector<64x512xbf16>
    %cst_9 = arith.constant dense<0.000000e+00> : vector<56x512xf32>
    %17 = tpu.matmul %13, %16, %cst_9 {dimension_numbers = #tpu.dot_dimension_numbers<[1], [0], [0], [1], [0, 0, 1, 1], [], []>} : vector<56x64xbf16>, vector<64x512xbf16>, vector<56x512xf32> -> vector<56x512xf32>
    %c0_10 = arith.constant 0 : index
    %c0_11 = arith.constant 0 : index
    %18 = vector.load %arg6[%c0_10, %c0_11] : memref<56x1xf32, #tpu.memory_space<vmem>>, vector<56x1xf32>
    %19 = vector.broadcast %18 : vector<56x1xf32> to vector<56x512xf32>
    %20 = arith.addf %17, %19 : vector<56x512xf32>
    %c0_12 = arith.constant 0 : index
    %c0_13 = arith.constant 0 : index
    %c0_14 = arith.constant 0 : index
    %21 = vector.load %arg7[%c0_12, %c0_13, %c0_14] : memref<1x56x512xf32, #tpu.memory_space<vmem>>, vector<1x56x512xf32>
    %22 = vector.shape_cast %21 : vector<1x56x512xf32> to vector<56x512xf32>
    %23 = vector.shape_cast %20 : vector<56x512xf32> to vector<1x56x512xf32>
    tpu.vector_store %arg7[%c0_12, %c0_13, %c0_14], %23 {strides = array<i32>} : memref<1x56x512xf32, #tpu.memory_space<vmem>>, vector<1x56x512xf32>,
    return
  }
  func.func @transform_0(%arg0: i32, %arg1: i32) -> (i32, i32, i32) {
    %c0_i32 = arith.constant 0 : i32
    %c0_i32_0 = arith.constant 0 : i32
    return %arg0, %c0_i32, %arg1 : i32, i32, i32
  }
  func.func @transform_1(%arg0: i32, %arg1: i32) -> (i32, i32) {
    %c0_i32 = arith.constant 0 : i32
    %c0_i32_0 = arith.constant 0 : i32
    %c0_i32_1 = arith.constant 0 : i32
    return %c0_i32, %c0_i32_0 : i32, i32
  }
  func.func @transform_2(%arg0: i32, %arg1: i32) -> (i32, i32, i32) {
    %c0_i32 = arith.constant 0 : i32
    %c0_i32_0 = arith.constant 0 : i32
    %c0_i32_1 = arith.constant 0 : i32
    return %arg0, %c0_i32, %c0_i32_0 : i32, i32, i32
  }
  func.func @transform_3(%arg0: i32, %arg1: i32) -> (i32, i32) {
    %c0_i32 = arith.constant 0 : i32
    %c0_i32_0 = arith.constant 0 : i32
    %c0_i32_1 = arith.constant 0 : i32
    return %c0_i32, %c0_i32_0 : i32, i32
  }
  func.func @transform_4(%arg0: i32, %arg1: i32) -> (i32, i32) {
    %c0_i32 = arith.constant 0 : i32
    %c0_i32_0 = arith.constant 0 : i32
    %c0_i32_1 = arith.constant 0 : i32
    return %c0_i32, %c0_i32_0 : i32, i32
  }
  func.func @transform_5(%arg0: i32, %arg1: i32) -> (i32, i32, i32) {
    %c0_i32 = arith.constant 0 : i32
    %c0_i32_0 = arith.constant 0 : i32
    return %arg0, %c0_i32, %arg1 : i32, i32, i32
  }
}

</mosaic_0001>

<llo_original>
// kernel: pointnet_kan_forward.2
$region0: #{pointnet_kan_forward.2}
  #allocation0 [shape = 'u32[]', space=smem, size = 0x4, offset = 0x4, fixed_abs, tag = 'smem constant byte address 0x4 - core index']
  #allocation1 [shape = 'u32[72,128]{1,0:T(1,128)}', space=vmem, size = 0x9000, scoped, tag = 'internal scratch']
  %s0 = inlined_call_operand.vmem [shape: f32[2,8,512], index: 0, kind: input, shape index: {}]
  %s1 = inlined_call_operand.vmem [shape: bf16[32,16], index: 1, kind: input, shape index: {}]
  %s2 = inlined_call_operand.vmem [shape: f32[32,1], index: 2, kind: input, shape index: {}]
  %s3 = inlined_call_operand.vmem [shape: bf16[256,64], index: 3, kind: input, shape index: {}]
  %s4 = inlined_call_operand.vmem [shape: f32[256,1], index: 4, kind: input, shape index: {}]
  %s5 = inlined_call_operand.vmem [shape: bf16[2,32,512], index: 5, kind: output, shape index: {0}]
  %s6 = inlined_call_operand.vmem [shape: f32[2,256,1], index: 6, kind: output, shape index: {1}]
  %7 = xla_tuple %s5, %s6
  %s8 = sld [smem:[#allocation0]]
  $region69: #{pointnet_kan_forward.2} parent=0
    _
  %s10 = ssub.s32 1, %s8
  %s11 = scalar_select 0, %s10, %s8
  loop: start=0, step=1, limit=4
  $region2: #{pointnet_kan_forward.2} parent=0 // loop_pre_header
    _
  $region3: #{pointnet_kan_forward.2} parent=0 // loop_header
    %s13 = sphi 0, %s17
    %p14 = scmp.ge.s32.totalorder %s13, 4
    %s20 = sphi 0, %s39
    %s21 = sphi 0, %s35
    %s22 = sphi 0, %s31
    %s23 = sphi 0, %s20
    %s24 = sphi 0, %s21
    %s25 = sphi 0, %s22
    %s26 = sphi 0, %s23
    %s27 = sphi 0, %s24
    %s28 = sphi 0, %s25
    %s46 = sphi 0, %s48
    %s49 = sphi 0, %s46
    %s50 = sphi 0, %s49
    %s66 = sphi 0, %s50
    %s70 = sphi 0, %s70
    %s72 = sphi 0, %s70
    %s73 = sphi 0, %s72
    %s87 = sphi 0, %s73
    %s91 = sphi 0, %s91
    %s93 = sphi 0, %s91
    %s94 = sphi 0, %s93
    %s108 = sphi 0, %s94
    %s112 = sphi 0, %s112
    %s114 = sphi 0, %s112
    %s115 = sphi 0, %s114
    %s129 = sphi 0, %s115
    %s133 = sphi 0, %s133
    %s135 = sphi 0, %s133
    %s136 = sphi 0, %s135
    %s150 = sphi 0, %s136
    %s160 = sphi 0, %s162
    %s163 = sphi 0, %s160
    %s164 = sphi 0, %s163
    %s180 = sphi 0, %s164
    %s188 = sphi 0, %s190
    %s191 = sphi 0, %s188
    %s192 = sphi 0, %s191
    %s208 = sphi 0, %s192
  $region4: #{pointnet_kan_forward.2} parent=0 // loop_header_branch
    %16 = sbr.rel (%p14) target = $region8
  $region5: #{pointnet_kan_forward.2} parent=0 // loop_body
    %s18 = ssub.s32 %s13, 1
    %s19 = ssub.s32 %s13, 2
    %s29 = sadd.s32 1, %s22
    %p30 = scmp.ge.s32.totalorder %s29, 1
    %s31 = scalar_select %p30, 0, %s29
    %s32 = sadd.s32 1, %s21
    %s33 = scalar_select %p30, %s32, %s21
    %p34 = scmp.ge.s32.totalorder %s33, 1
    %s35 = scalar_select %p34, 0, %s33
    %s36 = sadd.s32 1, %s20
    %s37 = scalar_select %p34, %s36, %s20
    %p38 = scmp.ge.s32.totalorder %s37, 2
    %s39 = scalar_select %p38, 0, %s37
    %s40 = sadd.s32 %s21, %s22
    %s41 = sadd.s32 %s35, %s31
    %s42 = ssub.s32 %s20, %s39
    %s43 = ssub.s32 %s40, %s41
    %s44 = sor.u32 %s42, %s43
    %p45 = scmp.eq.s32.totalorder %s44, 0
    %s47 = sadd.s32 %s46, 1
    %s48 = scalar_select %p45, %s46, %s47
    %p51 = pneg %p45
    %p52 = scmp.eq.s32.totalorder %s13, 1
    %p53 = por %p51, %p52
    %p54 = scmp.ne.s32.totalorder %s46, %s49
    %p55 = scmp.eq.s32.totalorder %s13, 0
    %p56 = por %p54, %p55
    %p57 = scmp.ne.s32.totalorder %s46, %s49
    %p58 = scmp.eq.s32.totalorder %s18, 1
    %p59 = por %p57, %p58
    %p60 = scmp.ne.s32.totalorder %s49, %s50
    %p61 = scmp.eq.s32.totalorder %s18, 0
    %p62 = por %p60, %p61
    %p63 = scmp.ne.s32.totalorder %s49, %s50
    %p64 = scmp.eq.s32.totalorder %s19, 1
    %p65 = por %p63, %p64
    %p67 = scmp.ne.s32.totalorder %s50, %s66
    %p68 = scmp.eq.s32.totalorder %s19, 0
    %p69 = por %p67, %p68
    %s71 = sadd.s32 %s70, 1
    %p74 = scmp.eq.s32.totalorder %s13, 1
    %p75 = scmp.ne.s32.totalorder %s70, %s72
    %p76 = scmp.eq.s32.totalorder %s13, 0
    %p77 = por %p75, %p76
    %p78 = scmp.ne.s32.totalorder %s70, %s72
    %p79 = scmp.eq.s32.totalorder %s18, 1
    %p80 = por %p78, %p79
    %p81 = scmp.ne.s32.totalorder %s72, %s73
    %p82 = scmp.eq.s32.totalorder %s18, 0
    %p83 = por %p81, %p82
    %p84 = scmp.ne.s32.totalorder %s72, %s73
    %p85 = scmp.eq.s32.totalorder %s19, 1
    %p86 = por %p84, %p85
    %p88 = scmp.ne.s32.totalorder %s73, %s87
    %p89 = scmp.eq.s32.totalorder %s19, 0
    %p90 = por %p88, %p89
    %s92 = sadd.s32 %s91, 1
    %p95 = scmp.eq.s32.totalorder %s13, 1
    %p96 = scmp.ne.s32.totalorder %s91, %s93
    %p97 = scmp.eq.s32.totalorder %s13, 0
    %p98 = por %p96, %p97
    %p99 = scmp.ne.s32.totalorder %s91, %s93
    %p100 = scmp.eq.s32.totalorder %s18, 1
    %p101 = por %p99, %p100
    %p102 = scmp.ne.s32.totalorder %s93, %s94
    %p103 = scmp.eq.s32.totalorder %s18, 0
    %p104 = por %p102, %p103
    %p105 = scmp.ne.s32.totalorder %s93, %s94
    %p106 = scmp.eq.s32.totalorder %s19, 1
    %p107 = por %p105, %p106
    %p109 = scmp.ne.s32.totalorder %s94, %s108
    %p110 = scmp.eq.s32.totalorder %s19, 0
    %p111 = por %p109, %p110
    %s113 = sadd.s32 %s112, 1
    %p116 = scmp.eq.s32.totalorder %s13, 1
    %p117 = scmp.ne.s32.totalorder %s112, %s114
    %p118 = scmp.eq.s32.totalorder %s13, 0
    %p119 = por %p117, %p118
    %p120 = scmp.ne.s32.totalorder %s112, %s114
    %p121 = scmp.eq.s32.totalorder %s18, 1
    %p122 = por %p120, %p121
    %p123 = scmp.ne.s32.totalorder %s114, %s115
    %p124 = scmp.eq.s32.totalorder %s18, 0
    %p125 = por %p123, %p124
    %p126 = scmp.ne.s32.totalorder %s114, %s115
    %p127 = scmp.eq.s32.totalorder %s19, 1
    %p128 = por %p126, %p127
    %p130 = scmp.ne.s32.totalorder %s115, %s129
    %p131 = scmp.eq.s32.totalorder %s19, 0
    %p132 = por %p130, %p131
    %s134 = sadd.s32 %s133, 1
    %p137 = scmp.eq.s32.totalorder %s13, 1
    %p138 = scmp.ne.s32.totalorder %s133, %s135
    %p139 = scmp.eq.s32.totalorder %s13, 0
    %p140 = por %p138, %p139
    %p141 = scmp.ne.s32.totalorder %s133, %s135
    %p142 = scmp.eq.s32.totalorder %s18, 1
    %p143 = por %p141, %p142
    %p144 = scmp.ne.s32.totalorder %s135, %s136
    %p145 = scmp.eq.s32.totalorder %s18, 0
    %p146 = por %p144, %p145
    %p147 = scmp.ne.s32.totalorder %s135, %s136
    %p148 = scmp.eq.s32.totalorder %s19, 1
    %p149 = por %p147, %p148
    %p151 = scmp.ne.s32.totalorder %s136, %s150
    %p152 = scmp.eq.s32.totalorder %s19, 0
    %p153 = por %p151, %p152
    %s154 = sadd.s32 %s21, %s22
    %s155 = sadd.s32 %s35, %s31
    %s156 = ssub.s32 %s20, %s39
    %s157 = ssub.s32 %s154, %s155
    %s158 = sor.u32 %s156, %s157
    %p159 = scmp.eq.s32.totalorder %s158, 0
    %s161 = sadd.s32 %s160, 1
    %s162 = scalar_select %p159, %s160, %s161
    %p165 = pneg %p159
    %p166 = scmp.eq.s32.totalorder %s13, 1
    %p167 = por %p165, %p166
    %p168 = scmp.ne.s32.totalorder %s160, %s163
    %p169 = scmp.eq.s32.totalorder %s13, 0
    %p170 = por %p168, %p169
    %p171 = scmp.ne.s32.totalorder %s160, %s163
    %p172 = scmp.eq.s32.totalorder %s18, 1
    %p173 = por %p171, %p172
    %p174 = scmp.ne.s32.totalorder %s163, %s164
    %p175 = scmp.eq.s32.totalorder %s18, 0
    %p176 = por %p174, %p175
    %p177 = scmp.ne.s32.totalorder %s163, %s164
    %p178 = scmp.eq.s32.totalorder %s19, 1
    %p179 = por %p177, %p178
    %p181 = scmp.ne.s32.totalorder %s164, %s180
    %p182 = scmp.eq.s32.totalorder %s19, 0
    %p183 = por %p181, %p182
    %s184 = sadd.s32 %s20, %s21
    %s185 = sadd.s32 %s39, %s35
    %s186 = ssub.s32 %s184, %s185
    %p187 = scmp.eq.s32.totalorder %s186, 0
    %s189 = sadd.s32 %s188, 1
    %s190 = scalar_select %p187, %s188, %s189
    %p193 = pneg %p187
    %p194 = scmp.eq.s32.totalorder %s13, 1
    %p195 = por %p193, %p194
    %p196 = scmp.ne.s32.totalorder %s188, %s191
    %p197 = scmp.eq.s32.totalorder %s13, 0
    %p198 = por %p196, %p197
    %p199 = scmp.ne.s32.totalorder %s188, %s191
    %p200 = scmp.eq.s32.totalorder %s18, 1
    %p201 = por %p199, %p200
    %p202 = scmp.ne.s32.totalorder %s191, %s192
    %p203 = scmp.eq.s32.totalorder %s18, 0
    %p204 = por %p202, %p203
    %p205 = scmp.ne.s32.totalorder %s191, %s192
    %p206 = scmp.eq.s32.totalorder %s19, 1
    %p207 = por %p205, %p206
    %p209 = scmp.ne.s32.totalorder %s192, %s208
    %p210 = scmp.eq.s32.totalorder %s19, 0
    %p211 = por %p209, %p210
    %p212 = scmp.le.s32.totalorder 1, %s13
    %p213 = scmp.lt.s32.totalorder %s13, 3
    %p214 = pnand %p212, %p213
    %p215 = pneg %p214
    // Predicated region
    $region9: #{pointnet_kan_forward.2} parent=5 // pred_check
      _
    $region10: #{pointnet_kan_forward.2} parent=5 // pred_check_branch
      %217 = sbr.rel (%p214) target = $region12
    $region11: #{pointnet_kan_forward.2} parent=5 // pred_region
      %s218 = ssub.s32 %s13, 1
      // Predicated region
      $region13: #{pointnet_kan_forward.2} parent=11 // pred_check
        %p219 = pneg %p83
      $region14: #{pointnet_kan_forward.2} parent=11 // pred_check_branch
        %221 = sbr.rel (%p219) target = $region16
      $region15: #{pointnet_kan_forward.2} parent=11 // pred_region
        _
      $region16: #{pointnet_kan_forward.2} parent=11 // pred_fallthru
        _
      // Predicated region
      $region17: #{pointnet_kan_forward.2} parent=11 // pred_check
        %p222 = pneg %p104
      $region18: #{pointnet_kan_forward.2} parent=11 // pred_check_branch
        %224 = sbr.rel (%p222) target = $region20
      $region19: #{pointnet_kan_forward.2} parent=11 // pred_region
        _
      $region20: #{pointnet_kan_forward.2} parent=11 // pred_fallthru
        _
      // Predicated region
      $region21: #{pointnet_kan_forward.2} parent=11 // pred_check
        %p225 = pneg %p125
      $region22: #{pointnet_kan_forward.2} parent=11 // pred_check_branch
        %227 = sbr.rel (%p225) target = $region24
      $region23: #{pointnet_kan_forward.2} parent=11 // pred_region
        _
      $region24: #{pointnet_kan_forward.2} parent=11 // pred_fallthru
        _
      // Predicated region
      $region25: #{pointnet_kan_forward.2} parent=11 // pred_check
        %p228 = pneg %p146
      $region26: #{pointnet_kan_forward.2} parent=11 // pred_check_branch
        %230 = sbr.rel (%p228) target = $region28
      $region27: #{pointnet_kan_forward.2} parent=11 // pred_region
        _
      $region28: #{pointnet_kan_forward.2} parent=11 // pred_fallthru
        _
    $region12: #{pointnet_kan_forward.2} parent=5 // pred_fallthru
      _
    %p231 = scmp.lt.s32.totalorder %s13, 2
    // Predicated region
    $region29: #{pointnet_kan_forward.2} parent=5 // pred_check
      %p232 = pneg %p231
    $region30: #{pointnet_kan_forward.2} parent=5 // pred_check_branch
      %234 = sbr.rel (%p232) target = $region32
    $region31: #{pointnet_kan_forward.2} parent=5 // pred_region
      // Predicated region
      $region33: #{pointnet_kan_forward.2} parent=31 // pred_check
        %p235 = pneg %p56
      $region34: #{pointnet_kan_forward.2} parent=31 // pred_check_branch
        %237 = sbr.rel (%p235) target = $region36
      $region35: #{pointnet_kan_forward.2} parent=31 // pred_region
        %s238 = sadd.s32 %s21, %s22
        %s239 = smul.u32 4, %s238
        %p240 = scmp.lt.s32.totalorder %s20, 1
        %s241 = scalar_select %p240, %s20, 1
        %p242 = scmp.lt.s32.totalorder %s239, 3
        %s243 = scalar_select %p242, %s239, 3
        %s244 = smul.addr %s241, 4
        %s245 = sadd.s32 %s243, %s244
        %s246 = smul.addr %s245, 8
        %s247 = scalar_lea.vmem %s0, %s246
        %s248 = sadd.s32 %s21, %s22
        %s249 = smul.u32 4, %s248
      $region36: #{pointnet_kan_forward.2} parent=31 // pred_fallthru
        _
    $region32: #{pointnet_kan_forward.2} parent=5 // pred_fallthru
      _
    %p250 = scmp.le.s32.totalorder 1, %s13
    %p251 = scmp.lt.s32.totalorder %s13, 3
    %p252 = pnand %p250, %p251
    %p253 = pneg %p252
    // Predicated region
    $region37: #{pointnet_kan_forward.2} parent=5 // pred_check
      _
    $region38: #{pointnet_kan_forward.2} parent=5 // pred_check_branch
      %255 = sbr.rel (%p252) target = $region40
    $region39: #{pointnet_kan_forward.2} parent=5 // pred_region
      %s256 = ssub.s32 %s13, 1
      %s257 = sadd.s32 %s24, %s25
      %s258 = smul.u32 4, %s257
      %p259 = scmp.lt.s32.totalorder %s23, 1
      %s260 = scalar_select %p259, %s23, 1
      %p261 = scmp.lt.s32.totalorder %s258, 3
      %s262 = scalar_select %p261, %s258, 3
      %s263 = smul.addr %s260, 4
      %s264 = sadd.s32 %s262, %s263
      %s265 = smul.addr %s264, 8
      %s266 = scalar_lea.vmem %s0, %s265
      %p267 = pneg %p62
      %p268 = pneg %p59
      %p269 = pneg %p83
      %p270 = pneg %p80
      %p271 = pneg %p104
      %p272 = pneg %p101
      %p273 = pneg %p125
      %p274 = pneg %p122
      %p275 = pneg %p146
      %p276 = pneg %p143
      %p277 = pneg %p176
      %p278 = pneg %p173
      %s279 = sadd.s32 %s24, %s25
      %s280 = smul.u32 4, %s279
      %p281 = scmp.lt.s32.totalorder %s23, 1
      %s282 = scalar_select %p281, %s23, 1
      %p283 = scmp.lt.s32.totalorder %s280, 3
      %s284 = scalar_select %p283, %s280, 3
      %s285 = smul.addr %s282, 16
      %s286 = sadd.s32 %s284, %s285
      %s287 = smul.addr %s286, 4
      %s288 = scalar_lea.vmem %s5, %s287
      %p289 = pneg %p204
      %p290 = pneg %p201
      %s291 = sadd.s32 %s23, %s24
      %p292 = scmp.lt.s32.totalorder %s291, 1
      %s293 = scalar_select %p292, %s291, 1
      %s294 = smul.addr %s293, 32
      %s295 = smul.addr %s294, 8
      %s296 = scalar_lea.vmem %s6, %s295
      %s297 = sadd.s32 %s24, %s25
      %s298 = smul.u32 4, %s297
      %p299 = scmp.lt.s32.totalorder %s23, 1
      %s300 = scalar_select %p299, %s23, 1
      %p301 = scmp.lt.s32.totalorder %s298, 3
      %s302 = scalar_select %p301, %s298, 3
      %s303 = smul.addr %s300, 4
      %s304 = sadd.s32 %s302, %s303
      %s305 = smul.addr %s304, 8
      %s306 = scalar_lea.vmem %s0, %s305
      %s307 = sadd.s32 %s24, %s25
      %s308 = smul.u32 4, %s307
      %s309 = sadd.s32 %s24, %s25
      %s310 = smul.u32 4, %s309
      %p311 = scmp.lt.s32.totalorder %s23, 1
      %s312 = scalar_select %p311, %s23, 1
      %p313 = scmp.lt.s32.totalorder %s310, 3
      %s314 = scalar_select %p313, %s310, 3
      %s315 = smul.addr %s312, 16
      %s316 = sadd.s32 %s314, %s315
      %s317 = smul.addr %s316, 4
      %s318 = scalar_lea.vmem %s5, %s317
      %s319 = sadd.s32 %s24, %s25
      %s320 = smul.u32 4, %s319
      %s321 = sadd.s32 %s23, %s24
      %p322 = scmp.lt.s32.totalorder %s321, 1
      %s323 = scalar_select %p322, %s321, 1
      %s324 = smul.addr %s323, 32
      %s325 = smul.addr %s324, 8
      %s326 = scalar_lea.vmem %s6, %s325
      %s327 = sadd.s32 %s23, %s24
      %v329 = vld [vmem:[%s306] sm:$0xff]
      %v330 = vld [vmem:[%s306 + $0x8] sm:$0xff]
      %v331 = vld [vmem:[%s306 + $0x10] sm:$0xff]
      %v332 = vld [vmem:[%s306 + $0x18] sm:$0xff]
      %v333 = vtanh.pop %v329
      %v334 = vtanh.pop %v330
      %v335 = vtanh.pop %v331
      %v336 = vtanh.pop %v332
      %v337 = vld [vmem:[%s1] sm:$0xf]
      %v338 = vld [vmem:[%s1 + $0x4] sm:$0xf]
      %v339 = vld [vmem:[%s1 + $0x8] sm:$0xf]
      %v340 = vld [vmem:[%s1 + $0xc] sm:$0xf]
      %v341 = vmul.f32 %v333, %v333
      %v342 = vmul.f32 %v334, %v334
      %v343 = vmul.f32 %v335, %v335
      %v344 = vmul.f32 %v336, %v336
      %v345 = vpack.c.bf16 %v341, %v333
      %v346 = vpack.c.bf16 %v342, %v334
      %v347 = vpack.c.bf16 %v343, %v335
      %v348 = vpack.c.bf16 %v344, %v336
      %v349 = vld [vmem:[%s2] sm:$0xff]
      %v350 = vld [vmem:[%s2 + $0x8] sm:$0xff]
      %v351 = vld [vmem:[%s2 + $0x10] sm:$0xff]
      %v352 = vld [vmem:[%s2 + $0x18] sm:$0xff]
      %354 = vset.pattern.permute.xlu0 0
      %355 = vperm.xlu0 %354, %v349
      %v356 = vpop.permute.xlu0 %355
      %359 = vset.pattern.permute.xlu0 0
      %360 = vperm.xlu0 %359, %v350
      %v361 = vpop.permute.xlu0 %360
      %364 = vset.pattern.permute.xlu0 0
      %365 = vperm.xlu0 %364, %v351
      %v366 = vpop.permute.xlu0 %365
      %369 = vset.pattern.permute.xlu0 0
      %370 = vperm.xlu0 %369, %v352
      %v371 = vpop.permute.xlu0 %370
      %v377 = vunpack.c.l.b16 %v337
      %v378 = vunpack.c.l.b16 %v338
      %v379 = vunpack.c.l.b16 %v339
      %v380 = vunpack.c.l.b16 %v340
      %v381 = vpack.c.b16 %v378, %v377
      %v382 = vpack.c.b16 %v380, %v379
      %vm383 = vcmask 130048
      %v385 = vsel %vm383, %v381, 0
      %v388 = vsel %vm383, %v382, 0
      %390 = vmatpush.bf16.msra.mxu0 0
      %391 = vmatpush.bf16.msra.mxu0 0
      %392 = vmatpush.bf16.msra.mxu0 0
      %393 = vmatpush.bf16.msra.mxu0 0
      %394 = vmatpush.bf16.msra.mxu0 0
      %395 = vmatpush.bf16.msra.mxu0 0
      %396 = vmatpush.bf16.msra.mxu0 0
      %397 = vmatpush.bf16.msra.mxu0 %v345
      %398 = vmatmul.bf16.gmra.mxu0 %v385
      %v399 = vpop.f32.mrf.mxu0
      %v400 = vadd.f32 %v356, %v399
      %v401 = vpop.f32.mrf.mxu0
      %v402 = vadd.f32 %v361, %v401
      %403 = vmatmul.bf16.gmra.mxu0 %v388
      %v404 = vpop.f32.mrf.mxu0
      %v405 = vadd.f32 %v366, %v404
      %v406 = vpop.f32.mrf.mxu0
      %v407 = vadd.f32 %v371, %v406
      %408 = vdwg.mxu0
      %409 = vmatpush.bf16.msra.mxu0 0
      %410 = vmatpush.bf16.msra.mxu0 0
      %411 = vmatpush.bf16.msra.mxu0 0
      %412 = vmatpush.bf16.msra.mxu0 0
      %413 = vmatpush.bf16.msra.mxu0 0
      %414 = vmatpush.bf16.msra.mxu0 0
      %415 = vmatpush.bf16.msra.mxu0 0
      %416 = vmatpush.bf16.msra.mxu0 %v346
      %417 = vmatmul.bf16.gmra.mxu0 %v385
      %v418 = vpop.f32.mrf.mxu0
      %v419 = vadd.f32 %v356, %v418
      %v420 = vpop.f32.mrf.mxu0
      %v421 = vadd.f32 %v361, %v420
      %422 = vmatmul.bf16.gmra.mxu0 %v388
      %v423 = vpop.f32.mrf.mxu0
      %v424 = vadd.f32 %v366, %v423
      %v425 = vpop.f32.mrf.mxu0
      %v426 = vadd.f32 %v371, %v425
      %427 = vdwg.mxu0
      %428 = vmatpush.bf16.msra.mxu0 0
      %429 = vmatpush.bf16.msra.mxu0 0
      %430 = vmatpush.bf16.msra.mxu0 0
      %431 = vmatpush.bf16.msra.mxu0 0
      %432 = vmatpush.bf16.msra.mxu0 0
      %433 = vmatpush.bf16.msra.mxu0 0
      %434 = vmatpush.bf16.msra.mxu0 0
      %435 = vmatpush.bf16.msra.mxu0 %v347
      %436 = vmatmul.bf16.gmra.mxu0 %v385
      %v437 = vpop.f32.mrf.mxu0
      %v438 = vadd.f32 %v356, %v437
      %v439 = vpop.f32.mrf.mxu0
      %v440 = vadd.f32 %v361, %v439
      %441 = vmatmul.bf16.gmra.mxu0 %v388
      %v442 = vpop.f32.mrf.mxu0
      %v443 = vadd.f32 %v366, %v442
      %v444 = vpop.f32.mrf.mxu0
      %v445 = vadd.f32 %v371, %v444
      %446 = vdwg.mxu0
      %447 = vmatpush.bf16.msra.mxu0 0
      %448 = vmatpush.bf16.msra.mxu0 0
      %449 = vmatpush.bf16.msra.mxu0 0
      %450 = vmatpush.bf16.msra.mxu0 0
      %451 = vmatpush.bf16.msra.mxu0 0
      %452 = vmatpush.bf16.msra.mxu0 0
      %453 = vmatpush.bf16.msra.mxu0 0
      %454 = vmatpush.bf16.msra.mxu0 %v348
      %455 = vmatmul.bf16.gmra.mxu0 %v385
      %v456 = vpop.f32.mrf.mxu0
      %v457 = vadd.f32 %v356, %v456
      %v458 = vpop.f32.mrf.mxu0
      %v459 = vadd.f32 %v361, %v458
      %460 = vmatmul.bf16.gmra.mxu0 %v388
      %v461 = vpop.f32.mrf.mxu0
      %v462 = vadd.f32 %v366, %v461
      %v463 = vpop.f32.mrf.mxu0
      %v464 = vadd.f32 %v371, %v463
      %465 = vdwg.mxu0
      %v466 = vtanh.pop %v400
      %v467 = vtanh.pop %v419
      %v468 = vtanh.pop %v438
      %v469 = vtanh.pop %v457
      %v470 = vtanh.pop %v402
      %v471 = vtanh.pop %v421
      %v472 = vtanh.pop %v440
      %v473 = vtanh.pop %v459
      %v474 = vtanh.pop %v405
      %v475 = vtanh.pop %v424
      %v476 = vtanh.pop %v443
      %v477 = vtanh.pop %v462
      %v478 = vtanh.pop %v407
      %v479 = vtanh.pop %v426
      %v480 = vtanh.pop %v445
      %v481 = vtanh.pop %v464
      %v482 = vpack.c.bf16 %v467, %v466
      %v483 = vpack.c.bf16 %v469, %v468
      %v484 = vpack.c.bf16 %v471, %v470
      %v485 = vpack.c.bf16 %v473, %v472
      %v486 = vpack.c.bf16 %v475, %v474
      %v487 = vpack.c.bf16 %v477, %v476
      %v488 = vpack.c.bf16 %v479, %v478
      %v489 = vpack.c.bf16 %v481, %v480
      %490 = vst [vmem:[%s318] sm:$0xff] %v482
      %491 = vst [vmem:[%s318 + $0x8] sm:$0xff] %v483
      %492 = vst [vmem:[%s318 + $0x10] sm:$0xff] %v484
      %493 = vst [vmem:[%s318 + $0x18] sm:$0xff] %v485
      %494 = vst [vmem:[%s318 + $0x20] sm:$0xff] %v486
      %495 = vst [vmem:[%s318 + $0x28] sm:$0xff] %v487
      %496 = vst [vmem:[%s318 + $0x30] sm:$0xff] %v488
      %497 = vst [vmem:[%s318 + $0x38] sm:$0xff] %v489
      %v498 = vld [vmem:[%s3] sm:$0xf]
      %v499 = vld [vmem:[%s3 + $0x4] sm:$0xf]
      %v500 = vld [vmem:[%s3 + $0x8] sm:$0xf]
      %v501 = vld [vmem:[%s3 + $0xc] sm:$0xf]
      %v502 = vld [vmem:[%s3 + $0x10] sm:$0xf]
      %v503 = vld [vmem:[%s3 + $0x14] sm:$0xf]
      %v504 = vld [vmem:[%s3 + $0x18] sm:$0xf]
      %v505 = vld [vmem:[%s3 + $0x1c] sm:$0xf]
      %v506 = vld [vmem:[%s3 + $0x20] sm:$0xf]
      %v507 = vld [vmem:[%s3 + $0x24] sm:$0xf]
      %v508 = vld [vmem:[%s3 + $0x28] sm:$0xf]
      %v509 = vld [vmem:[%s3 + $0x2c] sm:$0xf]
      %v510 = vld [vmem:[%s3 + $0x30] sm:$0xf]
      %v511 = vld [vmem:[%s3 + $0x34] sm:$0xf]
      %v512 = vld [vmem:[%s3 + $0x38] sm:$0xf]
      %v513 = vld [vmem:[%s3 + $0x3c] sm:$0xf]
      %v514 = vld [vmem:[%s3 + $0x40] sm:$0xf]
      %v515 = vld [vmem:[%s3 + $0x44] sm:$0xf]
      %v516 = vld [vmem:[%s3 + $0x48] sm:$0xf]
      %v517 = vld [vmem:[%s3 + $0x4c] sm:$0xf]
      %v518 = vld [vmem:[%s3 + $0x50] sm:$0xf]
      %v519 = vld [vmem:[%s3 + $0x54] sm:$0xf]
      %v520 = vld [vmem:[%s3 + $0x58] sm:$0xf]
      %v521 = vld [vmem:[%s3 + $0x5c] sm:$0xf]
      %v522 = vld [vmem:[%s3 + $0x60] sm:$0xf]
      %v523 = vld [vmem:[%s3 + $0x64] sm:$0xf]
      %v524 = vld [vmem:[%s3 + $0x68] sm:$0xf]
      %v525 = vld [vmem:[%s3 + $0x6c] sm:$0xf]
      %v526 = vld [vmem:[%s3 + $0x70] sm:$0xf]
      %v527 = vld [vmem:[%s3 + $0x74] sm:$0xf]
      %v528 = vld [vmem:[%s3 + $0x78] sm:$0xf]
      %v529 = vld [vmem:[%s3 + $0x7c] sm:$0xf]
      %v530 = vmul.f32 %v466, %v466
      %v531 = vmul.f32 %v467, %v467
      %v532 = vmul.f32 %v468, %v468
      %v533 = vmul.f32 %v469, %v469
      %v534 = vmul.f32 %v470, %v470
      %v535 = vmul.f32 %v471, %v471
      %v536 = vmul.f32 %v472, %v472
      %v537 = vmul.f32 %v473, %v473
      %v538 = vmul.f32 %v474, %v474
      %v539 = vmul.f32 %v475, %v475
      %v540 = vmul.f32 %v476, %v476
      %v541 = vmul.f32 %v477, %v477
      %v542 = vmul.f32 %v478, %v478
      %v543 = vmul.f32 %v479, %v479
      %v544 = vmul.f32 %v480, %v480
      %v545 = vmul.f32 %v481, %v481
      %v546 = vpack.c.bf16 %v470, %v466
      %v547 = vpack.c.bf16 %v471, %v467
      %v548 = vpack.c.bf16 %v472, %v468
      %v549 = vpack.c.bf16 %v473, %v469
      %v550 = vpack.c.bf16 %v478, %v474
      %v551 = vpack.c.bf16 %v479, %v475
      %v552 = vpack.c.bf16 %v480, %v476
      %v553 = vpack.c.bf16 %v481, %v477
      %v554 = vpack.c.bf16 %v534, %v530
      %v555 = vpack.c.bf16 %v535, %v531
      %v556 = vpack.c.bf16 %v536, %v532
      %v557 = vpack.c.bf16 %v537, %v533
      %v558 = vpack.c.bf16 %v542, %v538
      %v559 = vpack.c.bf16 %v543, %v539
      %v560 = vpack.c.bf16 %v544, %v540
      %v561 = vpack.c.bf16 %v545, %v541
      %v562 = vld [vmem:[%s4] sm:$0xff]
      %v563 = vld [vmem:[%s4 + $0x8] sm:$0xff]
      %v564 = vld [vmem:[%s4 + $0x10] sm:$0xff]
      %v565 = vld [vmem:[%s4 + $0x18] sm:$0xff]
      %v566 = vld [vmem:[%s4 + $0x20] sm:$0xff]
      %v567 = vld [vmem:[%s4 + $0x28] sm:$0xff]
      %v568 = vld [vmem:[%s4 + $0x30] sm:$0xff]
      %v569 = vld [vmem:[%s4 + $0x38] sm:$0xff]
      %v570 = vld [vmem:[%s4 + $0x40] sm:$0xff]
      %v571 = vld [vmem:[%s4 + $0x48] sm:$0xff]
      %v572 = vld [vmem:[%s4 + $0x50] sm:$0xff]
      %v573 = vld [vmem:[%s4 + $0x58] sm:$0xff]
      %v574 = vld [vmem:[%s4 + $0x60] sm:$0xff]
      %v575 = vld [vmem:[%s4 + $0x68] sm:$0xff]
      %v576 = vld [vmem:[%s4 + $0x70] sm:$0xff]
      %v577 = vld [vmem:[%s4 + $0x78] sm:$0xff]
      %v578 = vld [vmem:[%s4 + $0x80] sm:$0xff]
      %v579 = vld [vmem:[%s4 + $0x88] sm:$0xff]
      %v580 = vld [vmem:[%s4 + $0x90] sm:$0xff]
      %v581 = vld [vmem:[%s4 + $0x98] sm:$0xff]
      %v582 = vld [vmem:[%s4 + $0xa0] sm:$0xff]
      %v583 = vld [vmem:[%s4 + $0xa8] sm:$0xff]
      %v584 = vld [vmem:[%s4 + $0xb0] sm:$0xff]
      %v585 = vld [vmem:[%s4 + $0xb8] sm:$0xff]
      %v586 = vld [vmem:[%s4 + $0xc0] sm:$0xff]
      %v587 = vld [vmem:[%s4 + $0xc8] sm:$0xff]
      %v588 = vld [vmem:[%s4 + $0xd0] sm:$0xff]
      %v589 = vld [vmem:[%s4 + $0xd8] sm:$0xff]
      %v590 = vld [vmem:[%s4 + $0xe0] sm:$0xff]
      %v591 = vld [vmem:[%s4 + $0xe8] sm:$0xff]
      %v592 = vld [vmem:[%s4 + $0xf0] sm:$0xff]
      %v593 = vld [vmem:[%s4 + $0xf8] sm:$0xff]
      %595 = vset.pattern.permute.xlu0 0
      %596 = vperm.xlu0 %595, %v562
      %v597 = vpop.permute.xlu0 %596
      %600 = vset.pattern.permute.xlu0 0
      %601 = vperm.xlu0 %600, %v563
      %v602 = vpop.permute.xlu0 %601
      %605 = vset.pattern.permute.xlu0 0
      %606 = vperm.xlu0 %605, %v564
      %v607 = vpop.permute.xlu0 %606
      %610 = vset.pattern.permute.xlu0 0
      %611 = vperm.xlu0 %610, %v565
      %v612 = vpop.permute.xlu0 %611
      %615 = vset.pattern.permute.xlu0 0
      %616 = vperm.xlu0 %615, %v566
      %v617 = vpop.permute.xlu0 %616
      %620 = vset.pattern.permute.xlu0 0
      %621 = vperm.xlu0 %620, %v567
      %v622 = vpop.permute.xlu0 %621
      %625 = vset.pattern.permute.xlu0 0
      %626 = vperm.xlu0 %625, %v568
      %v627 = vpop.permute.xlu0 %626
      %630 = vset.pattern.permute.xlu0 0
      %631 = vperm.xlu0 %630, %v569
      %v632 = vpop.permute.xlu0 %631
      %635 = vset.pattern.permute.xlu0 0
      %636 = vperm.xlu0 %635, %v570
      %v637 = vpop.permute.xlu0 %636
      %640 = vset.pattern.permute.xlu0 0
      %641 = vperm.xlu0 %640, %v571
      %v642 = vpop.permute.xlu0 %641
      %645 = vset.pattern.permute.xlu0 0
      %646 = vperm.xlu0 %645, %v572
      %v647 = vpop.permute.xlu0 %646
      %650 = vset.pattern.permute.xlu0 0
      %651 = vperm.xlu0 %650, %v573
      %v652 = vpop.permute.xlu0 %651
      %655 = vset.pattern.permute.xlu0 0
      %656 = vperm.xlu0 %655, %v574
      %v657 = vpop.permute.xlu0 %656
      %660 = vset.pattern.permute.xlu0 0
      %661 = vperm.xlu0 %660, %v575
      %v662 = vpop.permute.xlu0 %661
      %665 = vset.pattern.permute.xlu0 0
      %666 = vperm.xlu0 %665, %v576
      %v667 = vpop.permute.xlu0 %666
      %670 = vset.pattern.permute.xlu0 0
      %671 = vperm.xlu0 %670, %v577
      %v672 = vpop.permute.xlu0 %671
      %675 = vset.pattern.permute.xlu0 0
      %676 = vperm.xlu0 %675, %v578
      %v677 = vpop.permute.xlu0 %676
      %680 = vset.pattern.permute.xlu0 0
      %681 = vperm.xlu0 %680, %v579
      %v682 = vpop.permute.xlu0 %681
      %685 = vset.pattern.permute.xlu0 0
      %686 = vperm.xlu0 %685, %v580
      %v687 = vpop.permute.xlu0 %686
      %690 = vset.pattern.permute.xlu0 0
      %691 = vperm.xlu0 %690, %v581
      %v692 = vpop.permute.xlu0 %691
      %695 = vset.pattern.permute.xlu0 0
      %696 = vperm.xlu0 %695, %v582
      %v697 = vpop.permute.xlu0 %696
      %700 = vset.pattern.permute.xlu0 0
      %701 = vperm.xlu0 %700, %v583
      %v702 = vpop.permute.xlu0 %701
      %705 = vset.pattern.permute.xlu0 0
      %706 = vperm.xlu0 %705, %v584
      %v707 = vpop.permute.xlu0 %706
      %710 = vset.pattern.permute.xlu0 0
      %711 = vperm.xlu0 %710, %v585
      %v712 = vpop.permute.xlu0 %711
      %715 = vset.pattern.permute.xlu0 0
      %716 = vperm.xlu0 %715, %v586
      %v717 = vpop.permute.xlu0 %716
      %720 = vset.pattern.permute.xlu0 0
      %721 = vperm.xlu0 %720, %v587
      %v722 = vpop.permute.xlu0 %721
      %725 = vset.pattern.permute.xlu0 0
      %726 = vperm.xlu0 %725, %v588
      %v727 = vpop.permute.xlu0 %726
      %730 = vset.pattern.permute.xlu0 0
      %731 = vperm.xlu0 %730, %v589
      %v732 = vpop.permute.xlu0 %731
      %735 = vset.pattern.permute.xlu0 0
      %736 = vperm.xlu0 %735, %v590
      %v737 = vpop.permute.xlu0 %736
      %740 = vset.pattern.permute.xlu0 0
      %741 = vperm.xlu0 %740, %v591
      %v742 = vpop.permute.xlu0 %741
      %745 = vset.pattern.permute.xlu0 0
      %746 = vperm.xlu0 %745, %v592
      %v747 = vpop.permute.xlu0 %746
      %750 = vset.pattern.permute.xlu0 0
      %751 = vperm.xlu0 %750, %v593
      %v752 = vpop.permute.xlu0 %751
      %v786 = vunpack.c.l.b16 %v498
      %v787 = vunpack.c.l.b16 %v499
      %v788 = vunpack.c.l.b16 %v500
      %v789 = vunpack.c.l.b16 %v501
      %v790 = vunpack.c.l.b16 %v502
      %v791 = vunpack.c.l.b16 %v503
      %v792 = vunpack.c.l.b16 %v504
      %v793 = vunpack.c.l.b16 %v505
      %v794 = vunpack.c.l.b16 %v506
      %v795 = vunpack.c.l.b16 %v507
      %v796 = vunpack.c.l.b16 %v508
      %v797 = vunpack.c.l.b16 %v509
      %v798 = vunpack.c.l.b16 %v510
      %v799 = vunpack.c.l.b16 %v511
      %v800 = vunpack.c.l.b16 %v512
      %v801 = vunpack.c.l.b16 %v513
      %v802 = vunpack.c.l.b16 %v514
      %v803 = vunpack.c.l.b16 %v515
      %v804 = vunpack.c.l.b16 %v516
      %v805 = vunpack.c.l.b16 %v517
      %v806 = vunpack.c.l.b16 %v518
      %v807 = vunpack.c.l.b16 %v519
      %v808 = vunpack.c.l.b16 %v520
      %v809 = vunpack.c.l.b16 %v521
      %v810 = vunpack.c.l.b16 %v522
      %v811 = vunpack.c.l.b16 %v523
      %v812 = vunpack.c.l.b16 %v524
      %v813 = vunpack.c.l.b16 %v525
      %v814 = vunpack.c.l.b16 %v526
      %v815 = vunpack.c.l.b16 %v527
      %v816 = vunpack.c.l.b16 %v528
      %v817 = vunpack.c.l.b16 %v529
      %v818 = vpack.c.b16 %v787, %v786
      %v819 = vpack.c.b16 %v789, %v788
      %v820 = vpack.c.b16 %v791, %v790
      %v821 = vpack.c.b16 %v793, %v792
      %v822 = vpack.c.b16 %v795, %v794
      %v823 = vpack.c.b16 %v797, %v796
      %v824 = vpack.c.b16 %v799, %v798
      %v825 = vpack.c.b16 %v801, %v800
      %v826 = vpack.c.b16 %v803, %v802
      %v827 = vpack.c.b16 %v805, %v804
      %v828 = vpack.c.b16 %v807, %v806
      %v829 = vpack.c.b16 %v809, %v808
      %v830 = vpack.c.b16 %v811, %v810
      %v831 = vpack.c.b16 %v813, %v812
      %v832 = vpack.c.b16 %v815, %v814
      %v833 = vpack.c.b16 %v817, %v816
      %vm834 = vcmask 523264
      %v836 = vsel %vm834, %v818, 0
      %v839 = vsel %vm834, %v819, 0
      %v842 = vsel %vm834, %v820, 0
      %v845 = vsel %vm834, %v821, 0
      %v848 = vsel %vm834, %v822, 0
      %v851 = vsel %vm834, %v823, 0
      %v854 = vsel %vm834, %v824, 0
      %v857 = vsel %vm834, %v825, 0
      %v860 = vsel %vm834, %v826, 0
      %v863 = vsel %vm834, %v827, 0
      %v866 = vsel %vm834, %v828, 0
      %v869 = vsel %vm834, %v829, 0
      %v872 = vsel %vm834, %v830, 0
      %v875 = vsel %vm834, %v831, 0
      %v878 = vsel %vm834, %v832, 0
      %v881 = vsel %vm834, %v833, 0
      %883 = vmatpush.bf16.msra.mxu0 0
      %884 = vmatpush.bf16.msra.mxu0 0
      %885 = vmatpush.bf16.msra.mxu0 0
      %886 = vmatpush.bf16.msra.mxu0 0
      %887 = vmatpush.bf16.msra.mxu0 %v558
      %888 = vmatpush.bf16.msra.mxu0 %v554
      %889 = vmatpush.bf16.msra.mxu0 %v550
      %890 = vmatpush.bf16.msra.mxu0 %v546
      %891 = vmatmul.bf16.gmra.mxu0 %v836
      %v892 = vpop.f32.mrf.mxu0
      %v893 = vadd.f32 %v597, %v892
      %v894 = vpop.f32.mrf.mxu0
      %v895 = vadd.f32 %v602, %v894
      %896 = vmatmul.bf16.gmra.mxu0 %v839
      %v897 = vpop.f32.mrf.mxu0
      %v898 = vadd.f32 %v607, %v897
      %v899 = vpop.f32.mrf.mxu0
      %v900 = vadd.f32 %v612, %v899
      %901 = vmatmul.bf16.gmra.mxu0 %v842
      %v902 = vpop.f32.mrf.mxu0
      %v903 = vadd.f32 %v617, %v902
      %v904 = vpop.f32.mrf.mxu0
      %v905 = vadd.f32 %v622, %v904
      %906 = vmatmul.bf16.gmra.mxu0 %v845
      %v907 = vpop.f32.mrf.mxu0
      %v908 = vadd.f32 %v627, %v907
      %v909 = vpop.f32.mrf.mxu0
      %v910 = vadd.f32 %v632, %v909
      %911 = vmatmul.bf16.gmra.mxu0 %v848
      %v912 = vpop.f32.mrf.mxu0
      %v913 = vadd.f32 %v637, %v912
      %v914 = vpop.f32.mrf.mxu0
      %v915 = vadd.f32 %v642, %v914
      %916 = vmatmul.bf16.gmra.mxu0 %v851
      %v917 = vpop.f32.mrf.mxu0
      %v918 = vadd.f32 %v647, %v917
      %v919 = vpop.f32.mrf.mxu0
      %v920 = vadd.f32 %v652, %v919
      %921 = vmatmul.bf16.gmra.mxu0 %v854
      %v922 = vpop.f32.mrf.mxu0
      %v923 = vadd.f32 %v657, %v922
      %v924 = vpop.f32.mrf.mxu0
      %v925 = vadd.f32 %v662, %v924
      %926 = vmatmul.bf16.gmra.mxu0 %v857
      %v927 = vpop.f32.mrf.mxu0
      %v928 = vadd.f32 %v667, %v927
      %v929 = vpop.f32.mrf.mxu0
      %v930 = vadd.f32 %v672, %v929
      %931 = vmatmul.bf16.gmra.mxu0 %v860
      %v932 = vpop.f32.mrf.mxu0
      %v933 = vadd.f32 %v677, %v932
      %v934 = vpop.f32.mrf.mxu0
      %v935 = vadd.f32 %v682, %v934
      %936 = vmatmul.bf16.gmra.mxu0 %v863
      %v937 = vpop.f32.mrf.mxu0
      %v938 = vadd.f32 %v687, %v937
      %v939 = vpop.f32.mrf.mxu0
      %v940 = vadd.f32 %v692, %v939
      %941 = vmatmul.bf16.gmra.mxu0 %v866
      %v942 = vpop.f32.mrf.mxu0
      %v943 = vadd.f32 %v697, %v942
      %v944 = vpop.f32.mrf.mxu0
      %v945 = vadd.f32 %v702, %v944
      %946 = vmatmul.bf16.gmra.mxu0 %v869
      %v947 = vpop.f32.mrf.mxu0
      %v948 = vadd.f32 %v707, %v947
      %v949 = vpop.f32.mrf.mxu0
      %v950 = vadd.f32 %v712, %v949
      %951 = vmatmul.bf16.gmra.mxu0 %v872
      %v952 = vpop.f32.mrf.mxu0
      %v953 = vadd.f32 %v717, %v952
      %v954 = vpop.f32.mrf.mxu0
      %v955 = vadd.f32 %v722, %v954
      %956 = vmatmul.bf16.gmra.mxu0 %v875
      %v957 = vpop.f32.mrf.mxu0
      %v958 = vadd.f32 %v727, %v957
      %v959 = vpop.f32.mrf.mxu0
      %v960 = vadd.f32 %v732, %v959
      %961 = vmatmul.bf16.gmra.mxu0 %v878
      %v962 = vpop.f32.mrf.mxu0
      %v963 = vadd.f32 %v737, %v962
      %v964 = vpop.f32.mrf.mxu0
      %v965 = vadd.f32 %v742, %v964
      %966 = vmatmul.bf16.gmra.mxu0 %v881
      %v967 = vpop.f32.mrf.mxu0
      %v968 = vadd.f32 %v747, %v967
      %v969 = vpop.f32.mrf.mxu0
      %v970 = vadd.f32 %v752, %v969
      %971 = vdwg.mxu0
      %972 = vmatpush.bf16.msra.mxu0 0
      %973 = vmatpush.bf16.msra.mxu0 0
      %974 = vmatpush.bf16.msra.mxu0 0
      %975 = vmatpush.bf16.msra.mxu0 0
      %976 = vmatpush.bf16.msra.mxu0 %v559
      %977 = vmatpush.bf16.msra.mxu0 %v555
      %978 = vmatpush.bf16.msra.mxu0 %v551
      %979 = vmatpush.bf16.msra.mxu0 %v547
      %980 = vmatmul.bf16.gmra.mxu0 %v836
      %v981 = vpop.f32.mrf.mxu0
      %v982 = vadd.f32 %v597, %v981
      %v983 = vpop.f32.mrf.mxu0
      %v984 = vadd.f32 %v602, %v983
      %985 = vmatmul.bf16.gmra.mxu0 %v839
      %v986 = vpop.f32.mrf.mxu0
      %v987 = vadd.f32 %v607, %v986
      %v988 = vpop.f32.mrf.mxu0
      %v989 = vadd.f32 %v612, %v988
      %990 = vmatmul.bf16.gmra.mxu0 %v842
      %v991 = vpop.f32.mrf.mxu0
      %v992 = vadd.f32 %v617, %v991
      %v993 = vpop.f32.mrf.mxu0
      %v994 = vadd.f32 %v622, %v993
      %995 = vmatmul.bf16.gmra.mxu0 %v845
      %v996 = vpop.f32.mrf.mxu0
      %v997 = vadd.f32 %v627, %v996
      %v998 = vpop.f32.mrf.mxu0
      %v999 = vadd.f32 %v632, %v998
      %1000 = vmatmul.bf16.gmra.mxu0 %v848
      %v1001 = vpop.f32.mrf.mxu0
      %v1002 = vadd.f32 %v637, %v1001
      %v1003 = vpop.f32.mrf.mxu0
      %v1004 = vadd.f32 %v642, %v1003
      %1005 = vmatmul.bf16.gmra.mxu0 %v851
      %v1006 = vpop.f32.mrf.mxu0
      %v1007 = vadd.f32 %v647, %v1006
      %v1008 = vpop.f32.mrf.mxu0
      %v1009 = vadd.f32 %v652, %v1008
      %1010 = vmatmul.bf16.gmra.mxu0 %v854
      %v1011 = vpop.f32.mrf.mxu0
      %v1012 = vadd.f32 %v657, %v1011
      %v1013 = vpop.f32.mrf.mxu0
      %v1014 = vadd.f32 %v662, %v1013
      %1015 = vmatmul.bf16.gmra.mxu0 %v857
      %v1016 = vpop.f32.mrf.mxu0
      %v1017 = vadd.f32 %v667, %v1016
      %v1018 = vpop.f32.mrf.mxu0
      %v1019 = vadd.f32 %v672, %v1018
      %1020 = vmatmul.bf16.gmra.mxu0 %v860
      %v1021 = vpop.f32.mrf.mxu0
      %v1022 = vadd.f32 %v677, %v1021
      %v1023 = vpop.f32.mrf.mxu0
      %v1024 = vadd.f32 %v682, %v1023
      %1025 = vmatmul.bf16.gmra.mxu0 %v863
      %v1026 = vpop.f32.mrf.mxu0
      %v1027 = vadd.f32 %v687, %v1026
      %v1028 = vpop.f32.mrf.mxu0
      %v1029 = vadd.f32 %v692, %v1028
      %1030 = vmatmul.bf16.gmra.mxu0 %v866
      %v1031 = vpop.f32.mrf.mxu0
      %v1032 = vadd.f32 %v697, %v1031
      %v1033 = vpop.f32.mrf.mxu0
      %v1034 = vadd.f32 %v702, %v1033
      %1035 = vmatmul.bf16.gmra.mxu0 %v869
      %v1036 = vpop.f32.mrf.mxu0
      %v1037 = vadd.f32 %v707, %v1036
      %v1038 = vpop.f32.mrf.mxu0
      %v1039 = vadd.f32 %v712, %v1038
      %1040 = vmatmul.bf16.gmra.mxu0 %v872
      %v1041 = vpop.f32.mrf.mxu0
      %v1042 = vadd.f32 %v717, %v1041
      %v1043 = vpop.f32.mrf.mxu0
      %v1044 = vadd.f32 %v722, %v1043
      %1045 = vmatmul.bf16.gmra.mxu0 %v875
      %v1046 = vpop.f32.mrf.mxu0
      %v1047 = vadd.f32 %v727, %v1046
      %v1048 = vpop.f32.mrf.mxu0
      %v1049 = vadd.f32 %v732, %v1048
      %1050 = vmatmul.bf16.gmra.mxu0 %v878
      %v1051 = vpop.f32.mrf.mxu0
      %v1052 = vadd.f32 %v737, %v1051
      %v1053 = vpop.f32.mrf.mxu0
      %v1054 = vadd.f32 %v742, %v1053
      %1055 = vmatmul.bf16.gmra.mxu0 %v881
      %v1056 = vpop.f32.mrf.mxu0
      %v1057 = vadd.f32 %v747, %v1056
      %v1058 = vpop.f32.mrf.mxu0
      %v1059 = vadd.f32 %v752, %v1058
      %1060 = vdwg.mxu0
      %1061 = vmatpush.bf16.msra.mxu0 0
      %1062 = vmatpush.bf16.msra.mxu0 0
      %1063 = vmatpush.bf16.msra.mxu0 0
      %1064 = vmatpush.bf16.msra.mxu0 0
      %1065 = vmatpush.bf16.msra.mxu0 %v560
      %1066 = vmatpush.bf16.msra.mxu0 %v556
      %1067 = vmatpush.bf16.msra.mxu0 %v552
      %1068 = vmatpush.bf16.msra.mxu0 %v548
      %1069 = vmatmul.bf16.gmra.mxu0 %v836
      %v1070 = vpop.f32.mrf.mxu0
      %v1071 = vadd.f32 %v597, %v1070
      %v1072 = vpop.f32.mrf.mxu0
      %v1073 = vadd.f32 %v602, %v1072
      %1074 = vmatmul.bf16.gmra.mxu0 %v839
      %v1075 = vpop.f32.mrf.mxu0
      %v1076 = vadd.f32 %v607, %v1075
      %v1077 = vpop.f32.mrf.mxu0
      %v1078 = vadd.f32 %v612, %v1077
      %1079 = vmatmul.bf16.gmra.mxu0 %v842
      %v1080 = vpop.f32.mrf.mxu0
      %v1081 = vadd.f32 %v617, %v1080
      %v1082 = vpop.f32.mrf.mxu0
      %v1083 = vadd.f32 %v622, %v1082
      %1084 = vmatmul.bf16.gmra.mxu0 %v845
      %v1085 = vpop.f32.mrf.mxu0
      %v1086 = vadd.f32 %v627, %v1085
      %v1087 = vpop.f32.mrf.mxu0
      %v1088 = vadd.f32 %v632, %v1087
      %1089 = vmatmul.bf16.gmra.mxu0 %v848
      %v1090 = vpop.f32.mrf.mxu0
      %v1091 = vadd.f32 %v637, %v1090
      %v1092 = vpop.f32.mrf.mxu0
      %v1093 = vadd.f32 %v642, %v1092
      %1094 = vmatmul.bf16.gmra.mxu0 %v851
      %v1095 = vpop.f32.mrf.mxu0
      %v1096 = vadd.f32 %v647, %v1095
      %v1097 = vpop.f32.mrf.mxu0
      %v1098 = vadd.f32 %v652, %v1097
      %1099 = vmatmul.bf16.gmra.mxu0 %v854
      %v1100 = vpop.f32.mrf.mxu0
      %v1101 = vadd.f32 %v657, %v1100
      %v1102 = vpop.f32.mrf.mxu0
      %v1103 = vadd.f32 %v662, %v1102
      %1104 = vmatmul.bf16.gmra.mxu0 %v857
      %v1105 = vpop.f32.mrf.mxu0
      %v1106 = vadd.f32 %v667, %v1105
      %v1107 = vpop.f32.mrf.mxu0
      %v1108 = vadd.f32 %v672, %v1107
      %1109 = vmatmul.bf16.gmra.mxu0 %v860
      %v1110 = vpop.f32.mrf.mxu0
      %v1111 = vadd.f32 %v677, %v1110
      %v1112 = vpop.f32.mrf.mxu0
      %v1113 = vadd.f32 %v682, %v1112
      %1114 = vmatmul.bf16.gmra.mxu0 %v863
      %v1115 = vpop.f32.mrf.mxu0
      %v1116 = vadd.f32 %v687, %v1115
      %v1117 = vpop.f32.mrf.mxu0
      %v1118 = vadd.f32 %v692, %v1117
      %1119 = vmatmul.bf16.gmra.mxu0 %v866
      %v1120 = vpop.f32.mrf.mxu0
      %v1121 = vadd.f32 %v697, %v1120
      %v1122 = vpop.f32.mrf.mxu0
      %v1123 = vadd.f32 %v702, %v1122
      %1124 = vmatmul.bf16.gmra.mxu0 %v869
      %v1125 = vpop.f32.mrf.mxu0
      %v1126 = vadd.f32 %v707, %v1125
      %v1127 = vpop.f32.mrf.mxu0
      %v1128 = vadd.f32 %v712, %v1127
      %1129 = vmatmul.bf16.gmra.mxu0 %v872
      %v1130 = vpop.f32.mrf.mxu0
      %v1131 = vadd.f32 %v717, %v1130
      %v1132 = vpop.f32.mrf.mxu0
      %v1133 = vadd.f32 %v722, %v1132
      %1134 = vmatmul.bf16.gmra.mxu0 %v875
      %v1135 = vpop.f32.mrf.mxu0
      %v1136 = vadd.f32 %v727, %v1135
      %v1137 = vpop.f32.mrf.mxu0
      %v1138 = vadd.f32 %v732, %v1137
      %1139 = vmatmul.bf16.gmra.mxu0 %v878
      %v1140 = vpop.f32.mrf.mxu0
      %v1141 = vadd.f32 %v737, %v1140
      %v1142 = vpop.f32.mrf.mxu0
      %v1143 = vadd.f32 %v742, %v1142
      %1144 = vmatmul.bf16.gmra.mxu0 %v881
      %v1145 = vpop.f32.mrf.mxu0
      %v1146 = vadd.f32 %v747, %v1145
      %v1147 = vpop.f32.mrf.mxu0
      %v1148 = vadd.f32 %v752, %v1147
      %1149 = vdwg.mxu0
      %1150 = vmatpush.bf16.msra.mxu0 0
      %1151 = vmatpush.bf16.msra.mxu0 0
      %1152 = vmatpush.bf16.msra.mxu0 0
      %1153 = vmatpush.bf16.msra.mxu0 0
      %1154 = vmatpush.bf16.msra.mxu0 %v561
      %1155 = vmatpush.bf16.msra.mxu0 %v557
      %1156 = vmatpush.bf16.msra.mxu0 %v553
      %1157 = vmatpush.bf16.msra.mxu0 %v549
      %1158 = vmatmul.bf16.gmra.mxu0 %v836
      %v1159 = vpop.f32.mrf.mxu0
      %v1160 = vadd.f32 %v597, %v1159
      %v1161 = vpop.f32.mrf.mxu0
      %v1162 = vadd.f32 %v602, %v1161
      %1163 = vmatmul.bf16.gmra.mxu0 %v839
      %v1164 = vpop.f32.mrf.mxu0
      %v1165 = vadd.f32 %v607, %v1164
      %v1166 = vpop.f32.mrf.mxu0
      %v1167 = vadd.f32 %v612, %v1166
      %1168 = vmatmul.bf16.gmra.mxu0 %v842
      %v1169 = vpop.f32.mrf.mxu0
      %v1170 = vadd.f32 %v617, %v1169
      %v1171 = vpop.f32.mrf.mxu0
      %v1172 = vadd.f32 %v622, %v1171
      %1173 = vmatmul.bf16.gmra.mxu0 %v845
      %v1174 = vpop.f32.mrf.mxu0
      %v1175 = vadd.f32 %v627, %v1174
      %v1176 = vpop.f32.mrf.mxu0
      %v1177 = vadd.f32 %v632, %v1176
      %1178 = vmatmul.bf16.gmra.mxu0 %v848
      %v1179 = vpop.f32.mrf.mxu0
      %v1180 = vadd.f32 %v637, %v1179
      %v1181 = vpop.f32.mrf.mxu0
      %v1182 = vadd.f32 %v642, %v1181
      %1183 = vmatmul.bf16.gmra.mxu0 %v851
      %v1184 = vpop.f32.mrf.mxu0
      %v1185 = vadd.f32 %v647, %v1184
      %v1186 = vpop.f32.mrf.mxu0
      %v1187 = vadd.f32 %v652, %v1186
      %1188 = vmatmul.bf16.gmra.mxu0 %v854
      %v1189 = vpop.f32.mrf.mxu0
      %v1190 = vadd.f32 %v657, %v1189
      %v1191 = vpop.f32.mrf.mxu0
      %v1192 = vadd.f32 %v662, %v1191
      %1193 = vmatmul.bf16.gmra.mxu0 %v857
      %v1194 = vpop.f32.mrf.mxu0
      %v1195 = vadd.f32 %v667, %v1194
      %v1196 = vpop.f32.mrf.mxu0
      %v1197 = vadd.f32 %v672, %v1196
      %1198 = vmatmul.bf16.gmra.mxu0 %v860
      %v1199 = vpop.f32.mrf.mxu0
      %v1200 = vadd.f32 %v677, %v1199
      %v1201 = vpop.f32.mrf.mxu0
      %v1202 = vadd.f32 %v682, %v1201
      %1203 = vmatmul.bf16.gmra.mxu0 %v863
      %v1204 = vpop.f32.mrf.mxu0
      %v1205 = vadd.f32 %v687, %v1204
      %v1206 = vpop.f32.mrf.mxu0
      %v1207 = vadd.f32 %v692, %v1206
      %1208 = vmatmul.bf16.gmra.mxu0 %v866
      %v1209 = vpop.f32.mrf.mxu0
      %v1210 = vadd.f32 %v697, %v1209
      %v1211 = vpop.f32.mrf.mxu0
      %v1212 = vadd.f32 %v702, %v1211
      %1213 = vmatmul.bf16.gmra.mxu0 %v869
      %v1214 = vpop.f32.mrf.mxu0
      %v1215 = vadd.f32 %v707, %v1214
      %v1216 = vpop.f32.mrf.mxu0
      %v1217 = vadd.f32 %v712, %v1216
      %1218 = vmatmul.bf16.gmra.mxu0 %v872
      %v1219 = vpop.f32.mrf.mxu0
      %v1220 = vadd.f32 %v717, %v1219
      %v1221 = vpop.f32.mrf.mxu0
      %v1222 = vadd.f32 %v722, %v1221
      %1223 = vmatmul.bf16.gmra.mxu0 %v875
      %v1224 = vpop.f32.mrf.mxu0
      %v1225 = vadd.f32 %v727, %v1224
      %v1226 = vpop.f32.mrf.mxu0
      %v1227 = vadd.f32 %v732, %v1226
      %1228 = vmatmul.bf16.gmra.mxu0 %v878
      %v1229 = vpop.f32.mrf.mxu0
      %v1230 = vadd.f32 %v737, %v1229
      %v1231 = vpop.f32.mrf.mxu0
      %v1232 = vadd.f32 %v742, %v1231
      %1233 = vmatmul.bf16.gmra.mxu0 %v881
      %v1234 = vpop.f32.mrf.mxu0
      %v1235 = vadd.f32 %v747, %v1234
      %v1236 = vpop.f32.mrf.mxu0
      %v1237 = vadd.f32 %v752, %v1236
      %1238 = vdwg.mxu0
      %v1239 = vmax.f32 %v893, %v982
      %v1240 = vmax.f32 %v1239, %v1071
      %v1241 = vmax.f32 %v1240, %v1160
      %1242 = vmax.xlane.f32.xlu0 %v1241
      %v1243 = vpop.xlane.xlu0 %1242
      %v1244 = vmax.f32 %v895, %v984
      %v1245 = vmax.f32 %v1244, %v1073
      %v1246 = vmax.f32 %v1245, %v1162
      %1247 = vmax.xlane.f32.xlu0 %v1246
      %v1248 = vpop.xlane.xlu0 %1247
      %v1249 = vmax.f32 %v898, %v987
      %v1250 = vmax.f32 %v1249, %v1076
      %v1251 = vmax.f32 %v1250, %v1165
      %1252 = vmax.xlane.f32.xlu0 %v1251
      %v1253 = vpop.xlane.xlu0 %1252
      %v1254 = vmax.f32 %v900, %v989
      %v1255 = vmax.f32 %v1254, %v1078
      %v1256 = vmax.f32 %v1255, %v1167
      %1257 = vmax.xlane.f32.xlu0 %v1256
      %v1258 = vpop.xlane.xlu0 %1257
      %v1259 = vmax.f32 %v903, %v992
      %v1260 = vmax.f32 %v1259, %v1081
      %v1261 = vmax.f32 %v1260, %v1170
      %1262 = vmax.xlane.f32.xlu0 %v1261
      %v1263 = vpop.xlane.xlu0 %1262
      %v1264 = vmax.f32 %v905, %v994
      %v1265 = vmax.f32 %v1264, %v1083
      %v1266 = vmax.f32 %v1265, %v1172
      %1267 = vmax.xlane.f32.xlu0 %v1266
      %v1268 = vpop.xlane.xlu0 %1267
      %v1269 = vmax.f32 %v908, %v997
      %v1270 = vmax.f32 %v1269, %v1086
      %v1271 = vmax.f32 %v1270, %v1175
      %1272 = vmax.xlane.f32.xlu0 %v1271
      %v1273 = vpop.xlane.xlu0 %1272
      %v1274 = vmax.f32 %v910, %v999
      %v1275 = vmax.f32 %v1274, %v1088
      %v1276 = vmax.f32 %v1275, %v1177
      %1277 = vmax.xlane.f32.xlu0 %v1276
      %v1278 = vpop.xlane.xlu0 %1277
      %v1279 = vmax.f32 %v913, %v1002
      %v1280 = vmax.f32 %v1279, %v1091
      %v1281 = vmax.f32 %v1280, %v1180
      %1282 = vmax.xlane.f32.xlu0 %v1281
      %v1283 = vpop.xlane.xlu0 %1282
      %v1284 = vmax.f32 %v915, %v1004
      %v1285 = vmax.f32 %v1284, %v1093
      %v1286 = vmax.f32 %v1285, %v1182
      %1287 = vmax.xlane.f32.xlu0 %v1286
      %v1288 = vpop.xlane.xlu0 %1287
      %v1289 = vmax.f32 %v918, %v1007
      %v1290 = vmax.f32 %v1289, %v1096
      %v1291 = vmax.f32 %v1290, %v1185
      %1292 = vmax.xlane.f32.xlu0 %v1291
      %v1293 = vpop.xlane.xlu0 %1292
      %v1294 = vmax.f32 %v920, %v1009
      %v1295 = vmax.f32 %v1294, %v1098
      %v1296 = vmax.f32 %v1295, %v1187
      %1297 = vmax.xlane.f32.xlu0 %v1296
      %v1298 = vpop.xlane.xlu0 %1297
      %v1299 = vmax.f32 %v923, %v1012
      %v1300 = vmax.f32 %v1299, %v1101
      %v1301 = vmax.f32 %v1300, %v1190
      %1302 = vmax.xlane.f32.xlu0 %v1301
      %v1303 = vpop.xlane.xlu0 %1302
      %v1304 = vmax.f32 %v925, %v1014
      %v1305 = vmax.f32 %v1304, %v1103
      %v1306 = vmax.f32 %v1305, %v1192
      %1307 = vmax.xlane.f32.xlu0 %v1306
      %v1308 = vpop.xlane.xlu0 %1307
      %v1309 = vmax.f32 %v928, %v1017
      %v1310 = vmax.f32 %v1309, %v1106
      %v1311 = vmax.f32 %v1310, %v1195
      %1312 = vmax.xlane.f32.xlu0 %v1311
      %v1313 = vpop.xlane.xlu0 %1312
      %v1314 = vmax.f32 %v930, %v1019
      %v1315 = vmax.f32 %v1314, %v1108
      %v1316 = vmax.f32 %v1315, %v1197
      %1317 = vmax.xlane.f32.xlu0 %v1316
      %v1318 = vpop.xlane.xlu0 %1317
      %v1319 = vmax.f32 %v933, %v1022
      %v1320 = vmax.f32 %v1319, %v1111
      %v1321 = vmax.f32 %v1320, %v1200
      %1322 = vmax.xlane.f32.xlu0 %v1321
      %v1323 = vpop.xlane.xlu0 %1322
      %v1324 = vmax.f32 %v935, %v1024
      %v1325 = vmax.f32 %v1324, %v1113
      %v1326 = vmax.f32 %v1325, %v1202
      %1327 = vmax.xlane.f32.xlu0 %v1326
      %v1328 = vpop.xlane.xlu0 %1327
      %v1329 = vmax.f32 %v938, %v1027
      %v1330 = vmax.f32 %v1329, %v1116
      %v1331 = vmax.f32 %v1330, %v1205
      %1332 = vmax.xlane.f32.xlu0 %v1331
      %v1333 = vpop.xlane.xlu0 %1332
      %v1334 = vmax.f32 %v940, %v1029
      %v1335 = vmax.f32 %v1334, %v1118
      %v1336 = vmax.f32 %v1335, %v1207
      %1337 = vmax.xlane.f32.xlu0 %v1336
      %v1338 = vpop.xlane.xlu0 %1337
      %v1339 = vmax.f32 %v943, %v1032
      %v1340 = vmax.f32 %v1339, %v1121
      %v1341 = vmax.f32 %v1340, %v1210
      %1342 = vmax.xlane.f32.xlu0 %v1341
      %v1343 = vpop.xlane.xlu0 %1342
      %v1344 = vmax.f32 %v945, %v1034
      %v1345 = vmax.f32 %v1344, %v1123
      %v1346 = vmax.f32 %v1345, %v1212
      %1347 = vmax.xlane.f32.xlu0 %v1346
      %v1348 = vpop.xlane.xlu0 %1347
      %v1349 = vmax.f32 %v948, %v1037
      %v1350 = vmax.f32 %v1349, %v1126
      %v1351 = vmax.f32 %v1350, %v1215
      %1352 = vmax.xlane.f32.xlu0 %v1351
      %v1353 = vpop.xlane.xlu0 %1352
      %v1354 = vmax.f32 %v950, %v1039
      %v1355 = vmax.f32 %v1354, %v1128
      %v1356 = vmax.f32 %v1355, %v1217
      %1357 = vmax.xlane.f32.xlu0 %v1356
      %v1358 = vpop.xlane.xlu0 %1357
      %v1359 = vmax.f32 %v953, %v1042
      %v1360 = vmax.f32 %v1359, %v1131
      %v1361 = vmax.f32 %v1360, %v1220
      %1362 = vmax.xlane.f32.xlu0 %v1361
      %v1363 = vpop.xlane.xlu0 %1362
      %v1364 = vmax.f32 %v955, %v1044
      %v1365 = vmax.f32 %v1364, %v1133
      %v1366 = vmax.f32 %v1365, %v1222
      %1367 = vmax.xlane.f32.xlu0 %v1366
      %v1368 = vpop.xlane.xlu0 %1367
      %v1369 = vmax.f32 %v958, %v1047
      %v1370 = vmax.f32 %v1369, %v1136
      %v1371 = vmax.f32 %v1370, %v1225
      %1372 = vmax.xlane.f32.xlu0 %v1371
      %v1373 = vpop.xlane.xlu0 %1372
      %v1374 = vmax.f32 %v960, %v1049
      %v1375 = vmax.f32 %v1374, %v1138
      %v1376 = vmax.f32 %v1375, %v1227
      %1377 = vmax.xlane.f32.xlu0 %v1376
      %v1378 = vpop.xlane.xlu0 %1377
      %v1379 = vmax.f32 %v963, %v1052
      %v1380 = vmax.f32 %v1379, %v1141
      %v1381 = vmax.f32 %v1380, %v1230
      %1382 = vmax.xlane.f32.xlu0 %v1381
      %v1383 = vpop.xlane.xlu0 %1382
      %v1384 = vmax.f32 %v965, %v1054
      %v1385 = vmax.f32 %v1384, %v1143
      %v1386 = vmax.f32 %v1385, %v1232
      %1387 = vmax.xlane.f32.xlu0 %v1386
      %v1388 = vpop.xlane.xlu0 %1387
      %v1389 = vmax.f32 %v968, %v1057
      %v1390 = vmax.f32 %v1389, %v1146
      %v1391 = vmax.f32 %v1390, %v1235
      %1392 = vmax.xlane.f32.xlu0 %v1391
      %v1393 = vpop.xlane.xlu0 %1392
      %v1394 = vmax.f32 %v970, %v1059
      %v1395 = vmax.f32 %v1394, %v1148
      %v1396 = vmax.f32 %v1395, %v1237
      %1397 = vmax.xlane.f32.xlu0 %v1396
      %v1398 = vpop.xlane.xlu0 %1397
      %p1399 = scmp.eq.s32.totalorder %s25, 0
      // Predicated region
      $region41: #{pointnet_kan_forward.2} parent=39 // pred_check
        %p1400 = pneg %p1399
      $region42: #{pointnet_kan_forward.2} parent=39 // pred_check_branch
        %1402 = sbr.rel (%p1400) target = $region44
      $region43: #{pointnet_kan_forward.2} parent=39 // pred_region
        %vm1403 = vcmask 7168
        %1404 = vst.msk [vmem:[%s326] sm:$0xff] %vm1403, %v1243
        %1405 = vst.msk [vmem:[%s326 + $0x8] sm:$0xff] %vm1403, %v1248
        %1406 = vst.msk [vmem:[%s326 + $0x10] sm:$0xff] %vm1403, %v1253
        %1407 = vst.msk [vmem:[%s326 + $0x18] sm:$0xff] %vm1403, %v1258
        %1408 = vst.msk [vmem:[%s326 + $0x20] sm:$0xff] %vm1403, %v1263
        %1409 = vst.msk [vmem:[%s326 + $0x28] sm:$0xff] %vm1403, %v1268
        %1410 = vst.msk [vmem:[%s326 + $0x30] sm:$0xff] %vm1403, %v1273
        %1411 = vst.msk [vmem:[%s326 + $0x38] sm:$0xff] %vm1403, %v1278
        %1412 = vst.msk [vmem:[%s326 + $0x40] sm:$0xff] %vm1403, %v1283
        %1413 = vst.msk [vmem:[%s326 + $0x48] sm:$0xff] %vm1403, %v1288
        %1414 = vst.msk [vmem:[%s326 + $0x50] sm:$0xff] %vm1403, %v1293
        %1415 = vst.msk [vmem:[%s326 + $0x58] sm:$0xff] %vm1403, %v1298
        %1416 = vst.msk [vmem:[%s326 + $0x60] sm:$0xff] %vm1403, %v1303
        %1417 = vst.msk [vmem:[%s326 + $0x68] sm:$0xff] %vm1403, %v1308
        %1418 = vst.msk [vmem:[%s326 + $0x70] sm:$0xff] %vm1403, %v1313
        %1419 = vst.msk [vmem:[%s326 + $0x78] sm:$0xff] %vm1403, %v1318
        %1420 = vst.msk [vmem:[%s326 + $0x80] sm:$0xff] %vm1403, %v1323
        %1421 = vst.msk [vmem:[%s326 + $0x88] sm:$0xff] %vm1403, %v1328
        %1422 = vst.msk [vmem:[%s326 + $0x90] sm:$0xff] %vm1403, %v1333
        %1423 = vst.msk [vmem:[%s326 + $0x98] sm:$0xff] %vm1403, %v1338
        %1424 = vst.msk [vmem:[%s326 + $0xa0] sm:$0xff] %vm1403, %v1343
        %1425 = vst.msk [vmem:[%s326 + $0xa8] sm:$0xff] %vm1403, %v1348
        %1426 = vst.msk [vmem:[%s326 + $0xb0] sm:$0xff] %vm1403, %v1353
        %1427 = vst.msk [vmem:[%s326 + $0xb8] sm:$0xff] %vm1403, %v1358
        %1428 = vst.msk [vmem:[%s326 + $0xc0] sm:$0xff] %vm1403, %v1363
        %1429 = vst.msk [vmem:[%s326 + $0xc8] sm:$0xff] %vm1403, %v1368
        %1430 = vst.msk [vmem:[%s326 + $0xd0] sm:$0xff] %vm1403, %v1373
        %1431 = vst.msk [vmem:[%s326 + $0xd8] sm:$0xff] %vm1403, %v1378
        %1432 = vst.msk [vmem:[%s326 + $0xe0] sm:$0xff] %vm1403, %v1383
        %1433 = vst.msk [vmem:[%s326 + $0xe8] sm:$0xff] %vm1403, %v1388
        %1434 = vst.msk [vmem:[%s326 + $0xf0] sm:$0xff] %vm1403, %v1393
        %1435 = vst.msk [vmem:[%s326 + $0xf8] sm:$0xff] %vm1403, %v1398
      $region44: #{pointnet_kan_forward.2} parent=39 // pred_fallthru
        _
      %p1436 = scmp.ne.s32.totalorder %s25, 0
      // Predicated region
      $region45: #{pointnet_kan_forward.2} parent=39 // pred_check
        %p1437 = pneg %p1436
      $region46: #{pointnet_kan_forward.2} parent=39 // pred_check_branch
        %1439 = sbr.rel (%p1437) target = $region48
      $region47: #{pointnet_kan_forward.2} parent=39 // pred_region
        %v1440 = vld [vmem:[%s326] sm:$0xff]
        %v1441 = vld [vmem:[%s326 + $0x8] sm:$0xff]
        %v1442 = vld [vmem:[%s326 + $0x10] sm:$0xff]
        %v1443 = vld [vmem:[%s326 + $0x18] sm:$0xff]
        %v1444 = vld [vmem:[%s326 + $0x20] sm:$0xff]
        %v1445 = vld [vmem:[%s326 + $0x28] sm:$0xff]
        %v1446 = vld [vmem:[%s326 + $0x30] sm:$0xff]
        %v1447 = vld [vmem:[%s326 + $0x38] sm:$0xff]
        %v1448 = vld [vmem:[%s326 + $0x40] sm:$0xff]
        %v1449 = vld [vmem:[%s326 + $0x48] sm:$0xff]
        %v1450 = vld [vmem:[%s326 + $0x50] sm:$0xff]
        %v1451 = vld [vmem:[%s326 + $0x58] sm:$0xff]
        %v1452 = vld [vmem:[%s326 + $0x60] sm:$0xff]
        %v1453 = vld [vmem:[%s326 + $0x68] sm:$0xff]
        %v1454 = vld [vmem:[%s326 + $0x70] sm:$0xff]
        %v1455 = vld [vmem:[%s326 + $0x78] sm:$0xff]
        %v1456 = vld [vmem:[%s326 + $0x80] sm:$0xff]
        %v1457 = vld [vmem:[%s326 + $0x88] sm:$0xff]
        %v1458 = vld [vmem:[%s326 + $0x90] sm:$0xff]
        %v1459 = vld [vmem:[%s326 + $0x98] sm:$0xff]
        %v1460 = vld [vmem:[%s326 + $0xa0] sm:$0xff]
        %v1461 = vld [vmem:[%s326 + $0xa8] sm:$0xff]
        %v1462 = vld [vmem:[%s326 + $0xb0] sm:$0xff]
        %v1463 = vld [vmem:[%s326 + $0xb8] sm:$0xff]
        %v1464 = vld [vmem:[%s326 + $0xc0] sm:$0xff]
        %v1465 = vld [vmem:[%s326 + $0xc8] sm:$0xff]
        %v1466 = vld [vmem:[%s326 + $0xd0] sm:$0xff]
        %v1467 = vld [vmem:[%s326 + $0xd8] sm:$0xff]
        %v1468 = vld [vmem:[%s326 + $0xe0] sm:$0xff]
        %v1469 = vld [vmem:[%s326 + $0xe8] sm:$0xff]
        %v1470 = vld [vmem:[%s326 + $0xf0] sm:$0xff]
        %v1471 = vld [vmem:[%s326 + $0xf8] sm:$0xff]
        %v1472 = vmax.f32 %v1440, %v1243
        %v1473 = vmax.f32 %v1441, %v1248
        %v1474 = vmax.f32 %v1442, %v1253
        %v1475 = vmax.f32 %v1443, %v1258
        %v1476 = vmax.f32 %v1444, %v1263
        %v1477 = vmax.f32 %v1445, %v1268
        %v1478 = vmax.f32 %v1446, %v1273
        %v1479 = vmax.f32 %v1447, %v1278
        %v1480 = vmax.f32 %v1448, %v1283
        %v1481 = vmax.f32 %v1449, %v1288
        %v1482 = vmax.f32 %v1450, %v1293
        %v1483 = vmax.f32 %v1451, %v1298
        %v1484 = vmax.f32 %v1452, %v1303
        %v1485 = vmax.f32 %v1453, %v1308
        %v1486 = vmax.f32 %v1454, %v1313
        %v1487 = vmax.f32 %v1455, %v1318
        %v1488 = vmax.f32 %v1456, %v1323
        %v1489 = vmax.f32 %v1457, %v1328
        %v1490 = vmax.f32 %v1458, %v1333
        %v1491 = vmax.f32 %v1459, %v1338
        %v1492 = vmax.f32 %v1460, %v1343
        %v1493 = vmax.f32 %v1461, %v1348
        %v1494 = vmax.f32 %v1462, %v1353
        %v1495 = vmax.f32 %v1463, %v1358
        %v1496 = vmax.f32 %v1464, %v1363
        %v1497 = vmax.f32 %v1465, %v1368
        %v1498 = vmax.f32 %v1466, %v1373
        %v1499 = vmax.f32 %v1467, %v1378
        %v1500 = vmax.f32 %v1468, %v1383
        %v1501 = vmax.f32 %v1469, %v1388
        %v1502 = vmax.f32 %v1470, %v1393
        %v1503 = vmax.f32 %v1471, %v1398
        %vm1504 = vcmask 7168
        %1505 = vst.msk [vmem:[%s326] sm:$0xff] %vm1504, %v1472
        %1506 = vst.msk [vmem:[%s326 + $0x8] sm:$0xff] %vm1504, %v1473
        %1507 = vst.msk [vmem:[%s326 + $0x10] sm:$0xff] %vm1504, %v1474
        %1508 = vst.msk [vmem:[%s326 + $0x18] sm:$0xff] %vm1504, %v1475
        %1509 = vst.msk [vmem:[%s326 + $0x20] sm:$0xff] %vm1504, %v1476
        %1510 = vst.msk [vmem:[%s326 + $0x28] sm:$0xff] %vm1504, %v1477
        %1511 = vst.msk [vmem:[%s326 + $0x30] sm:$0xff] %vm1504, %v1478
        %1512 = vst.msk [vmem:[%s326 + $0x38] sm:$0xff] %vm1504, %v1479
        %1513 = vst.msk [vmem:[%s326 + $0x40] sm:$0xff] %vm1504, %v1480
        %1514 = vst.msk [vmem:[%s326 + $0x48] sm:$0xff] %vm1504, %v1481
        %1515 = vst.msk [vmem:[%s326 + $0x50] sm:$0xff] %vm1504, %v1482
        %1516 = vst.msk [vmem:[%s326 + $0x58] sm:$0xff] %vm1504, %v1483
        %1517 = vst.msk [vmem:[%s326 + $0x60] sm:$0xff] %vm1504, %v1484
        %1518 = vst.msk [vmem:[%s326 + $0x68] sm:$0xff] %vm1504, %v1485
        %1519 = vst.msk [vmem:[%s326 + $0x70] sm:$0xff] %vm1504, %v1486
        %1520 = vst.msk [vmem:[%s326 + $0x78] sm:$0xff] %vm1504, %v1487
        %1521 = vst.msk [vmem:[%s326 + $0x80] sm:$0xff] %vm1504, %v1488
        %1522 = vst.msk [vmem:[%s326 + $0x88] sm:$0xff] %vm1504, %v1489
        %1523 = vst.msk [vmem:[%s326 + $0x90] sm:$0xff] %vm1504, %v1490
        %1524 = vst.msk [vmem:[%s326 + $0x98] sm:$0xff] %vm1504, %v1491
        %1525 = vst.msk [vmem:[%s326 + $0xa0] sm:$0xff] %vm1504, %v1492
        %1526 = vst.msk [vmem:[%s326 + $0xa8] sm:$0xff] %vm1504, %v1493
        %1527 = vst.msk [vmem:[%s326 + $0xb0] sm:$0xff] %vm1504, %v1494
        %1528 = vst.msk [vmem:[%s326 + $0xb8] sm:$0xff] %vm1504, %v1495
        %1529 = vst.msk [vmem:[%s326 + $0xc0] sm:$0xff] %vm1504, %v1496
        %1530 = vst.msk [vmem:[%s326 + $0xc8] sm:$0xff] %vm1504, %v1497
        %1531 = vst.msk [vmem:[%s326 + $0xd0] sm:$0xff] %vm1504, %v1498
        %1532 = vst.msk [vmem:[%s326 + $0xd8] sm:$0xff] %vm1504, %v1499
        %1533 = vst.msk [vmem:[%s326 + $0xe0] sm:$0xff] %vm1504, %v1500
        %1534 = vst.msk [vmem:[%s326 + $0xe8] sm:$0xff] %vm1504, %v1501
        %1535 = vst.msk [vmem:[%s326 + $0xf0] sm:$0xff] %vm1504, %v1502
        %1536 = vst.msk [vmem:[%s326 + $0xf8] sm:$0xff] %vm1504, %v1503
      $region48: #{pointnet_kan_forward.2} parent=39 // pred_fallthru
        _
      %s1537 = sadd.s32 %s24, %s25
      %s1538 = smul.u32 4, %s1537
      %p1539 = scmp.lt.s32.totalorder %s23, 1
      %s1540 = scalar_select %p1539, %s23, 1
      %p1541 = scmp.lt.s32.totalorder %s1538, 3
      %s1542 = scalar_select %p1541, %s1538, 3
      %s1543 = smul.addr %s1540, 16
      %s1544 = sadd.s32 %s1542, %s1543
      %s1545 = smul.addr %s1544, 4
      %s1546 = scalar_lea.vmem %s5, %s1545
      %s1547 = sadd.s32 %s23, %s24
      %p1548 = scmp.lt.s32.totalorder %s1547, 1
      %s1549 = scalar_select %p1548, %s1547, 1
      %s1550 = smul.addr %s1549, 32
      %s1551 = smul.addr %s1550, 8
      %s1552 = scalar_lea.vmem %s6, %s1551
      // Predicated region
      $region49: #{pointnet_kan_forward.2} parent=39 // pred_check
        %p1553 = pneg %p173
      $region50: #{pointnet_kan_forward.2} parent=39 // pred_check_branch
        %1555 = sbr.rel (%p1553) target = $region52
      $region51: #{pointnet_kan_forward.2} parent=39 // pred_region
        %s1556 = sadd.s32 %s24, %s25
        %s1557 = smul.u32 4, %s1556
      $region52: #{pointnet_kan_forward.2} parent=39 // pred_fallthru
        _
      // Predicated region
      $region53: #{pointnet_kan_forward.2} parent=39 // pred_check
        %p1558 = pneg %p201
      $region54: #{pointnet_kan_forward.2} parent=39 // pred_check_branch
        %1560 = sbr.rel (%p1558) target = $region56
      $region55: #{pointnet_kan_forward.2} parent=39 // pred_region
        %s1561 = sadd.s32 %s23, %s24
      $region56: #{pointnet_kan_forward.2} parent=39 // pred_fallthru
        _
    $region40: #{pointnet_kan_forward.2} parent=5 // pred_fallthru
      _
    %p1562 = scmp.le.s32.totalorder 2, %s13
    // Predicated region
    $region57: #{pointnet_kan_forward.2} parent=5 // pred_check
      %p1563 = pneg %p1562
    $region58: #{pointnet_kan_forward.2} parent=5 // pred_check_branch
      %1565 = sbr.rel (%p1563) target = $region60
    $region59: #{pointnet_kan_forward.2} parent=5 // pred_region
      %s1566 = ssub.s32 %s13, 2
      // Predicated region
      $region61: #{pointnet_kan_forward.2} parent=59 // pred_check
        %p1567 = pneg %p179
      $region62: #{pointnet_kan_forward.2} parent=59 // pred_check_branch
        %1569 = sbr.rel (%p1567) target = $region64
      $region63: #{pointnet_kan_forward.2} parent=59 // pred_region
        %s1570 = sadd.s32 %s27, %s28
        %s1571 = smul.u32 4, %s1570
        %p1572 = scmp.lt.s32.totalorder %s26, 1
        %s1573 = scalar_select %p1572, %s26, 1
        %p1574 = scmp.lt.s32.totalorder %s1571, 3
        %s1575 = scalar_select %p1574, %s1571, 3
        %s1576 = smul.addr %s1573, 16
        %s1577 = sadd.s32 %s1575, %s1576
        %s1578 = smul.addr %s1577, 4
        %s1579 = scalar_lea.vmem %s5, %s1578
      $region64: #{pointnet_kan_forward.2} parent=59 // pred_fallthru
        _
      // Predicated region
      $region65: #{pointnet_kan_forward.2} parent=59 // pred_check
        %p1580 = pneg %p207
      $region66: #{pointnet_kan_forward.2} parent=59 // pred_check_branch
        %1582 = sbr.rel (%p1580) target = $region68
      $region67: #{pointnet_kan_forward.2} parent=59 // pred_region
        %s1583 = sadd.s32 %s26, %s27
        %p1584 = scmp.lt.s32.totalorder %s1583, 1
        %s1585 = scalar_select %p1584, %s1583, 1
        %s1586 = smul.addr %s1585, 32
        %s1587 = smul.addr %s1586, 8
        %s1588 = scalar_lea.vmem %s6, %s1587
      $region68: #{pointnet_kan_forward.2} parent=59 // pred_fallthru
        _
    $region60: #{pointnet_kan_forward.2} parent=5 // pred_fallthru
      _
  $region6: #{pointnet_kan_forward.2} parent=0 // loop_footer
    %s17 = sadd.s32 1, %s13
  $region7: #{pointnet_kan_forward.2} parent=0 // loop_footer_branch
    %12 = sbr.rel target = $region3
  $region8: #{pointnet_kan_forward.2} parent=0 // loop_exit
    _

// kernel: pointnet_kan_forward.3
$region0: #{pointnet_kan_forward.3}
  #allocation0 [shape = 'u32[]', space=smem, size = 0x4, offset = 0x4, fixed_abs, tag = 'smem constant byte address 0x4 - core index']
  #allocation1 [shape = 'u32[72,128]{1,0:T(1,128)}', space=vmem, size = 0x9000, scoped, tag = 'internal scratch']
  %s0 = inlined_call_operand.vmem [shape: bf16[2,32,512], index: 0, kind: input, shape index: {}]
  %s1 = inlined_call_operand.vmem [shape: bf16[32,64], index: 1, kind: input, shape index: {}]
  %s2 = inlined_call_operand.vmem [shape: f32[2,32,1], index: 2, kind: input, shape index: {}]
  %s3 = inlined_call_operand.vmem [shape: bf16[56,64], index: 3, kind: input, shape index: {}]
  %s4 = inlined_call_operand.vmem [shape: f32[56,1], index: 4, kind: input, shape index: {}]
  %s5 = inlined_call_operand.vmem [shape: f32[2,56,512], index: 5, kind: output, shape index: {}]
  %s6 = sld [smem:[#allocation0]]
  $region53: #{pointnet_kan_forward.3} parent=0
    _
  %s8 = ssub.s32 1, %s6
  %s9 = scalar_select 0, %s8, %s6
  loop: start=0, step=1, limit=4
  $region2: #{pointnet_kan_forward.3} parent=0 // loop_pre_header
    _
  $region3: #{pointnet_kan_forward.3} parent=0 // loop_header
    %s11 = sphi 0, %s15
    %p12 = scmp.ge.s32.totalorder %s11, 4
    %s18 = sphi 0, %s30
    %s19 = sphi 0, %s26
    %s20 = sphi 0, %s18
    %s21 = sphi 0, %s19
    %s22 = sphi 0, %s20
    %s23 = sphi 0, %s21
    %s35 = sphi 0, %s37
    %s38 = sphi 0, %s35
    %s39 = sphi 0, %s38
    %s55 = sphi 0, %s39
    %s59 = sphi 0, %s59
    %s61 = sphi 0, %s59
    %s62 = sphi 0, %s61
    %s76 = sphi 0, %s62
    %s82 = sphi 0, %s84
    %s85 = sphi 0, %s82
    %s86 = sphi 0, %s85
    %s102 = sphi 0, %s86
    %s106 = sphi 0, %s106
    %s108 = sphi 0, %s106
    %s109 = sphi 0, %s108
    %s123 = sphi 0, %s109
    %s127 = sphi 0, %s127
    %s129 = sphi 0, %s127
    %s130 = sphi 0, %s129
    %s144 = sphi 0, %s130
    %s152 = sphi 0, %s154
    %s155 = sphi 0, %s152
    %s156 = sphi 0, %s155
    %s172 = sphi 0, %s156
  $region4: #{pointnet_kan_forward.3} parent=0 // loop_header_branch
    %14 = sbr.rel (%p12) target = $region8
  $region5: #{pointnet_kan_forward.3} parent=0 // loop_body
    %s16 = ssub.s32 %s11, 1
    %s17 = ssub.s32 %s11, 2
    %s24 = sadd.s32 1, %s19
    %p25 = scmp.ge.s32.totalorder %s24, 1
    %s26 = scalar_select %p25, 0, %s24
    %s27 = sadd.s32 1, %s18
    %s28 = scalar_select %p25, %s27, %s18
    %p29 = scmp.ge.s32.totalorder %s28, 2
    %s30 = scalar_select %p29, 0, %s28
    %s31 = ssub.s32 %s18, %s30
    %s32 = ssub.s32 %s19, %s26
    %s33 = sor.u32 %s31, %s32
    %p34 = scmp.eq.s32.totalorder %s33, 0
    %s36 = sadd.s32 %s35, 1
    %s37 = scalar_select %p34, %s35, %s36
    %p40 = pneg %p34
    %p41 = scmp.eq.s32.totalorder %s11, 1
    %p42 = por %p40, %p41
    %p43 = scmp.ne.s32.totalorder %s35, %s38
    %p44 = scmp.eq.s32.totalorder %s11, 0
    %p45 = por %p43, %p44
    %p46 = scmp.ne.s32.totalorder %s35, %s38
    %p47 = scmp.eq.s32.totalorder %s16, 1
    %p48 = por %p46, %p47
    %p49 = scmp.ne.s32.totalorder %s38, %s39
    %p50 = scmp.eq.s32.totalorder %s16, 0
    %p51 = por %p49, %p50
    %p52 = scmp.ne.s32.totalorder %s38, %s39
    %p53 = scmp.eq.s32.totalorder %s17, 1
    %p54 = por %p52, %p53
    %p56 = scmp.ne.s32.totalorder %s39, %s55
    %p57 = scmp.eq.s32.totalorder %s17, 0
    %p58 = por %p56, %p57
    %s60 = sadd.s32 %s59, 1
    %p63 = scmp.eq.s32.totalorder %s11, 1
    %p64 = scmp.ne.s32.totalorder %s59, %s61
    %p65 = scmp.eq.s32.totalorder %s11, 0
    %p66 = por %p64, %p65
    %p67 = scmp.ne.s32.totalorder %s59, %s61
    %p68 = scmp.eq.s32.totalorder %s16, 1
    %p69 = por %p67, %p68
    %p70 = scmp.ne.s32.totalorder %s61, %s62
    %p71 = scmp.eq.s32.totalorder %s16, 0
    %p72 = por %p70, %p71
    %p73 = scmp.ne.s32.totalorder %s61, %s62
    %p74 = scmp.eq.s32.totalorder %s17, 1
    %p75 = por %p73, %p74
    %p77 = scmp.ne.s32.totalorder %s62, %s76
    %p78 = scmp.eq.s32.totalorder %s17, 0
    %p79 = por %p77, %p78
    %s80 = ssub.s32 %s18, %s30
    %p81 = scmp.eq.s32.totalorder %s80, 0
    %s83 = sadd.s32 %s82, 1
    %s84 = scalar_select %p81, %s82, %s83
    %p87 = pneg %p81
    %p88 = scmp.eq.s32.totalorder %s11, 1
    %p89 = por %p87, %p88
    %p90 = scmp.ne.s32.totalorder %s82, %s85
    %p91 = scmp.eq.s32.totalorder %s11, 0
    %p92 = por %p90, %p91
    %p93 = scmp.ne.s32.totalorder %s82, %s85
    %p94 = scmp.eq.s32.totalorder %s16, 1
    %p95 = por %p93, %p94
    %p96 = scmp.ne.s32.totalorder %s85, %s86
    %p97 = scmp.eq.s32.totalorder %s16, 0
    %p98 = por %p96, %p97
    %p99 = scmp.ne.s32.totalorder %s85, %s86
    %p100 = scmp.eq.s32.totalorder %s17, 1
    %p101 = por %p99, %p100
    %p103 = scmp.ne.s32.totalorder %s86, %s102
    %p104 = scmp.eq.s32.totalorder %s17, 0
    %p105 = por %p103, %p104
    %s107 = sadd.s32 %s106, 1
    %p110 = scmp.eq.s32.totalorder %s11, 1
    %p111 = scmp.ne.s32.totalorder %s106, %s108
    %p112 = scmp.eq.s32.totalorder %s11, 0
    %p113 = por %p111, %p112
    %p114 = scmp.ne.s32.totalorder %s106, %s108
    %p115 = scmp.eq.s32.totalorder %s16, 1
    %p116 = por %p114, %p115
    %p117 = scmp.ne.s32.totalorder %s108, %s109
    %p118 = scmp.eq.s32.totalorder %s16, 0
    %p119 = por %p117, %p118
    %p120 = scmp.ne.s32.totalorder %s108, %s109
    %p121 = scmp.eq.s32.totalorder %s17, 1
    %p122 = por %p120, %p121
    %p124 = scmp.ne.s32.totalorder %s109, %s123
    %p125 = scmp.eq.s32.totalorder %s17, 0
    %p126 = por %p124, %p125
    %s128 = sadd.s32 %s127, 1
    %p131 = scmp.eq.s32.totalorder %s11, 1
    %p132 = scmp.ne.s32.totalorder %s127, %s129
    %p133 = scmp.eq.s32.totalorder %s11, 0
    %p134 = por %p132, %p133
    %p135 = scmp.ne.s32.totalorder %s127, %s129
    %p136 = scmp.eq.s32.totalorder %s16, 1
    %p137 = por %p135, %p136
    %p138 = scmp.ne.s32.totalorder %s129, %s130
    %p139 = scmp.eq.s32.totalorder %s16, 0
    %p140 = por %p138, %p139
    %p141 = scmp.ne.s32.totalorder %s129, %s130
    %p142 = scmp.eq.s32.totalorder %s17, 1
    %p143 = por %p141, %p142
    %p145 = scmp.ne.s32.totalorder %s130, %s144
    %p146 = scmp.eq.s32.totalorder %s17, 0
    %p147 = por %p145, %p146
    %s148 = ssub.s32 %s18, %s30
    %s149 = ssub.s32 %s19, %s26
    %s150 = sor.u32 %s148, %s149
    %p151 = scmp.eq.s32.totalorder %s150, 0
    %s153 = sadd.s32 %s152, 1
    %s154 = scalar_select %p151, %s152, %s153
    %p157 = pneg %p151
    %p158 = scmp.eq.s32.totalorder %s11, 1
    %p159 = por %p157, %p158
    %p160 = scmp.ne.s32.totalorder %s152, %s155
    %p161 = scmp.eq.s32.totalorder %s11, 0
    %p162 = por %p160, %p161
    %p163 = scmp.ne.s32.totalorder %s152, %s155
    %p164 = scmp.eq.s32.totalorder %s16, 1
    %p165 = por %p163, %p164
    %p166 = scmp.ne.s32.totalorder %s155, %s156
    %p167 = scmp.eq.s32.totalorder %s16, 0
    %p168 = por %p166, %p167
    %p169 = scmp.ne.s32.totalorder %s155, %s156
    %p170 = scmp.eq.s32.totalorder %s17, 1
    %p171 = por %p169, %p170
    %p173 = scmp.ne.s32.totalorder %s156, %s172
    %p174 = scmp.eq.s32.totalorder %s17, 0
    %p175 = por %p173, %p174
    %p176 = scmp.le.s32.totalorder 1, %s11
    %p177 = scmp.lt.s32.totalorder %s11, 3
    %p178 = pnand %p176, %p177
    %p179 = pneg %p178
    // Predicated region
    $region9: #{pointnet_kan_forward.3} parent=5 // pred_check
      _
    $region10: #{pointnet_kan_forward.3} parent=5 // pred_check_branch
      %181 = sbr.rel (%p178) target = $region12
    $region11: #{pointnet_kan_forward.3} parent=5 // pred_region
      %s182 = ssub.s32 %s11, 1
      // Predicated region
      $region13: #{pointnet_kan_forward.3} parent=11 // pred_check
        %p183 = pneg %p72
      $region14: #{pointnet_kan_forward.3} parent=11 // pred_check_branch
        %185 = sbr.rel (%p183) target = $region16
      $region15: #{pointnet_kan_forward.3} parent=11 // pred_region
        _
      $region16: #{pointnet_kan_forward.3} parent=11 // pred_fallthru
        _
      // Predicated region
      $region17: #{pointnet_kan_forward.3} parent=11 // pred_check
        %p186 = pneg %p119
      $region18: #{pointnet_kan_forward.3} parent=11 // pred_check_branch
        %188 = sbr.rel (%p186) target = $region20
      $region19: #{pointnet_kan_forward.3} parent=11 // pred_region
        _
      $region20: #{pointnet_kan_forward.3} parent=11 // pred_fallthru
        _
      // Predicated region
      $region21: #{pointnet_kan_forward.3} parent=11 // pred_check
        %p189 = pneg %p140
      $region22: #{pointnet_kan_forward.3} parent=11 // pred_check_branch
        %191 = sbr.rel (%p189) target = $region24
      $region23: #{pointnet_kan_forward.3} parent=11 // pred_region
        _
      $region24: #{pointnet_kan_forward.3} parent=11 // pred_fallthru
        _
    $region12: #{pointnet_kan_forward.3} parent=5 // pred_fallthru
      _
    %p192 = scmp.lt.s32.totalorder %s11, 2
    // Predicated region
    $region25: #{pointnet_kan_forward.3} parent=5 // pred_check
      %p193 = pneg %p192
    $region26: #{pointnet_kan_forward.3} parent=5 // pred_check_branch
      %195 = sbr.rel (%p193) target = $region28
    $region27: #{pointnet_kan_forward.3} parent=5 // pred_region
      // Predicated region
      $region29: #{pointnet_kan_forward.3} parent=27 // pred_check
        %p196 = pneg %p45
      $region30: #{pointnet_kan_forward.3} parent=27 // pred_check_branch
        %198 = sbr.rel (%p196) target = $region32
      $region31: #{pointnet_kan_forward.3} parent=27 // pred_region
        %s199 = smul.u32 4, %s19
        %p200 = scmp.lt.s32.totalorder %s18, 1
        %s201 = scalar_select %p200, %s18, 1
        %p202 = scmp.lt.s32.totalorder %s199, 3
        %s203 = scalar_select %p202, %s199, 3
        %s204 = smul.addr %s201, 16
        %s205 = sadd.s32 %s203, %s204
        %s206 = smul.addr %s205, 4
        %s207 = scalar_lea.vmem %s0, %s206
        %s208 = smul.u32 4, %s19
      $region32: #{pointnet_kan_forward.3} parent=27 // pred_fallthru
        _
      // Predicated region
      $region33: #{pointnet_kan_forward.3} parent=27 // pred_check
        %p209 = pneg %p92
      $region34: #{pointnet_kan_forward.3} parent=27 // pred_check_branch
        %211 = sbr.rel (%p209) target = $region36
      $region35: #{pointnet_kan_forward.3} parent=27 // pred_region
        %p212 = scmp.lt.s32.totalorder %s18, 1
        %s213 = scalar_select %p212, %s18, 1
        %s214 = smul.addr %s213, 4
        %s215 = smul.addr %s214, 8
        %s216 = scalar_lea.vmem %s2, %s215
      $region36: #{pointnet_kan_forward.3} parent=27 // pred_fallthru
        _
    $region28: #{pointnet_kan_forward.3} parent=5 // pred_fallthru
      _
    %p217 = scmp.le.s32.totalorder 1, %s11
    %p218 = scmp.lt.s32.totalorder %s11, 3
    %p219 = pnand %p217, %p218
    %p220 = pneg %p219
    // Predicated region
    $region37: #{pointnet_kan_forward.3} parent=5 // pred_check
      _
    $region38: #{pointnet_kan_forward.3} parent=5 // pred_check_branch
      %222 = sbr.rel (%p219) target = $region40
    $region39: #{pointnet_kan_forward.3} parent=5 // pred_region
      %s223 = ssub.s32 %s11, 1
      %s224 = smul.u32 4, %s21
      %p225 = scmp.lt.s32.totalorder %s20, 1
      %s226 = scalar_select %p225, %s20, 1
      %p227 = scmp.lt.s32.totalorder %s224, 3
      %s228 = scalar_select %p227, %s224, 3
      %s229 = smul.addr %s226, 16
      %s230 = sadd.s32 %s228, %s229
      %s231 = smul.addr %s230, 4
      %s232 = scalar_lea.vmem %s0, %s231
      %p233 = pneg %p51
      %p234 = pneg %p48
      %p235 = pneg %p72
      %p236 = pneg %p69
      %p237 = scmp.lt.s32.totalorder %s20, 1
      %s238 = scalar_select %p237, %s20, 1
      %s239 = smul.addr %s238, 4
      %s240 = smul.addr %s239, 8
      %s241 = scalar_lea.vmem %s2, %s240
      %p242 = pneg %p98
      %p243 = pneg %p95
      %p244 = pneg %p119
      %p245 = pneg %p116
      %p246 = pneg %p140
      %p247 = pneg %p137
      %p248 = pneg %p168
      %p249 = pneg %p165
      %s250 = smul.u32 4, %s21
      %p251 = scmp.lt.s32.totalorder %s20, 1
      %s252 = scalar_select %p251, %s20, 1
      %p253 = scmp.lt.s32.totalorder %s250, 3
      %s254 = scalar_select %p253, %s250, 3
      %s255 = smul.addr %s252, 28
      %s256 = sadd.s32 %s254, %s255
      %s257 = smul.addr %s256, 8
      %s258 = scalar_lea.vmem %s5, %s257
      %s259 = smul.u32 4, %s21
      %p260 = scmp.lt.s32.totalorder %s20, 1
      %s261 = scalar_select %p260, %s20, 1
      %p262 = scmp.lt.s32.totalorder %s259, 3
      %s263 = scalar_select %p262, %s259, 3
      %s264 = smul.addr %s261, 16
      %s265 = sadd.s32 %s263, %s264
      %s266 = smul.addr %s265, 4
      %s267 = scalar_lea.vmem %s0, %s266
      %s268 = smul.u32 4, %s21
      %p269 = scmp.lt.s32.totalorder %s20, 1
      %s270 = scalar_select %p269, %s20, 1
      %s271 = smul.addr %s270, 4
      %s272 = smul.addr %s271, 8
      %s273 = scalar_lea.vmem %s2, %s272
      %s274 = smul.u32 4, %s21
      %p275 = scmp.lt.s32.totalorder %s20, 1
      %s276 = scalar_select %p275, %s20, 1
      %p277 = scmp.lt.s32.totalorder %s274, 3
      %s278 = scalar_select %p277, %s274, 3
      %s279 = smul.addr %s276, 28
      %s280 = sadd.s32 %s278, %s279
      %s281 = smul.addr %s280, 8
      %s282 = scalar_lea.vmem %s5, %s281
      %s283 = smul.u32 4, %s21
      %v285 = vld [vmem:[%s267] sm:$0xff]
      %v286 = vld [vmem:[%s267 + $0x8] sm:$0xff]
      %v287 = vld [vmem:[%s267 + $0x10] sm:$0xff]
      %v288 = vld [vmem:[%s267 + $0x18] sm:$0xff]
      %v289 = vld [vmem:[%s267 + $0x20] sm:$0xff]
      %v290 = vld [vmem:[%s267 + $0x28] sm:$0xff]
      %v291 = vld [vmem:[%s267 + $0x30] sm:$0xff]
      %v292 = vld [vmem:[%s267 + $0x38] sm:$0xff]
      %v293 = vunpack.c.l.bf16 %v285
      %v294 = vunpack.c.h.bf16 %v285
      %v295 = vunpack.c.l.bf16 %v286
      %v296 = vunpack.c.h.bf16 %v286
      %v297 = vunpack.c.l.bf16 %v287
      %v298 = vunpack.c.h.bf16 %v287
      %v299 = vunpack.c.l.bf16 %v288
      %v300 = vunpack.c.h.bf16 %v288
      %v301 = vunpack.c.l.bf16 %v289
      %v302 = vunpack.c.h.bf16 %v289
      %v303 = vunpack.c.l.bf16 %v290
      %v304 = vunpack.c.h.bf16 %v290
      %v305 = vunpack.c.l.bf16 %v291
      %v306 = vunpack.c.h.bf16 %v291
      %v307 = vunpack.c.l.bf16 %v292
      %v308 = vunpack.c.h.bf16 %v292
      %v309 = vld [vmem:[%s1] sm:$0xf]
      %v310 = vld [vmem:[%s1 + $0x4] sm:$0xf]
      %v311 = vld [vmem:[%s1 + $0x8] sm:$0xf]
      %v312 = vld [vmem:[%s1 + $0xc] sm:$0xf]
      %v313 = vmul.f32 %v293, %v293
      %v314 = vmul.f32 %v294, %v294
      %v315 = vmul.f32 %v295, %v295
      %v316 = vmul.f32 %v296, %v296
      %v317 = vmul.f32 %v297, %v297
      %v318 = vmul.f32 %v298, %v298
      %v319 = vmul.f32 %v299, %v299
      %v320 = vmul.f32 %v300, %v300
      %v321 = vmul.f32 %v301, %v301
      %v322 = vmul.f32 %v302, %v302
      %v323 = vmul.f32 %v303, %v303
      %v324 = vmul.f32 %v304, %v304
      %v325 = vmul.f32 %v305, %v305
      %v326 = vmul.f32 %v306, %v306
      %v327 = vmul.f32 %v307, %v307
      %v328 = vmul.f32 %v308, %v308
      %v329 = vpack.c.bf16 %v297, %v293
      %v330 = vpack.c.bf16 %v298, %v294
      %v331 = vpack.c.bf16 %v299, %v295
      %v332 = vpack.c.bf16 %v300, %v296
      %v333 = vpack.c.bf16 %v305, %v301
      %v334 = vpack.c.bf16 %v306, %v302
      %v335 = vpack.c.bf16 %v307, %v303
      %v336 = vpack.c.bf16 %v308, %v304
      %v337 = vpack.c.bf16 %v317, %v313
      %v338 = vpack.c.bf16 %v318, %v314
      %v339 = vpack.c.bf16 %v319, %v315
      %v340 = vpack.c.bf16 %v320, %v316
      %v341 = vpack.c.bf16 %v325, %v321
      %v342 = vpack.c.bf16 %v326, %v322
      %v343 = vpack.c.bf16 %v327, %v323
      %v344 = vpack.c.bf16 %v328, %v324
      %v345 = vld [vmem:[%s273] sm:$0xff]
      %v346 = vld [vmem:[%s273 + $0x8] sm:$0xff]
      %v347 = vld [vmem:[%s273 + $0x10] sm:$0xff]
      %v348 = vld [vmem:[%s273 + $0x18] sm:$0xff]
      %350 = vset.pattern.permute.xlu0 0
      %351 = vperm.xlu0 %350, %v345
      %v352 = vpop.permute.xlu0 %351
      %355 = vset.pattern.permute.xlu0 0
      %356 = vperm.xlu0 %355, %v346
      %v357 = vpop.permute.xlu0 %356
      %360 = vset.pattern.permute.xlu0 0
      %361 = vperm.xlu0 %360, %v347
      %v362 = vpop.permute.xlu0 %361
      %365 = vset.pattern.permute.xlu0 0
      %366 = vperm.xlu0 %365, %v348
      %v367 = vpop.permute.xlu0 %366
      %v373 = vunpack.c.l.b16 %v309
      %v374 = vunpack.c.l.b16 %v310
      %v375 = vunpack.c.l.b16 %v311
      %v376 = vunpack.c.l.b16 %v312
      %v377 = vpack.c.b16 %v374, %v373
      %v378 = vpack.c.b16 %v376, %v375
      %vm379 = vcmask 523264
      %v381 = vsel %vm379, %v377, 0
      %v384 = vsel %vm379, %v378, 0
      %386 = vmatpush.bf16.msra.mxu0 0
      %387 = vmatpush.bf16.msra.mxu0 0
      %388 = vmatpush.bf16.msra.mxu0 0
      %389 = vmatpush.bf16.msra.mxu0 0
      %390 = vmatpush.bf16.msra.mxu0 %v341
      %391 = vmatpush.bf16.msra.mxu0 %v337
      %392 = vmatpush.bf16.msra.mxu0 %v333
      %393 = vmatpush.bf16.msra.mxu0 %v329
      %394 = vmatmul.bf16.gmra.mxu0 %v381
      %v395 = vpop.f32.mrf.mxu0
      %v396 = vadd.f32 %v352, %v395
      %v397 = vpop.f32.mrf.mxu0
      %v398 = vadd.f32 %v357, %v397
      %399 = vmatmul.bf16.gmra.mxu0 %v384
      %v400 = vpop.f32.mrf.mxu0
      %v401 = vadd.f32 %v362, %v400
      %v402 = vpop.f32.mrf.mxu0
      %v403 = vadd.f32 %v367, %v402
      %404 = vdwg.mxu0
      %405 = vmatpush.bf16.msra.mxu0 0
      %406 = vmatpush.bf16.msra.mxu0 0
      %407 = vmatpush.bf16.msra.mxu0 0
      %408 = vmatpush.bf16.msra.mxu0 0
      %409 = vmatpush.bf16.msra.mxu0 %v342
      %410 = vmatpush.bf16.msra.mxu0 %v338
      %411 = vmatpush.bf16.msra.mxu0 %v334
      %412 = vmatpush.bf16.msra.mxu0 %v330
      %413 = vmatmul.bf16.gmra.mxu0 %v381
      %v414 = vpop.f32.mrf.mxu0
      %v415 = vadd.f32 %v352, %v414
      %v416 = vpop.f32.mrf.mxu0
      %v417 = vadd.f32 %v357, %v416
      %418 = vmatmul.bf16.gmra.mxu0 %v384
      %v419 = vpop.f32.mrf.mxu0
      %v420 = vadd.f32 %v362, %v419
      %v421 = vpop.f32.mrf.mxu0
      %v422 = vadd.f32 %v367, %v421
      %423 = vdwg.mxu0
      %424 = vmatpush.bf16.msra.mxu0 0
      %425 = vmatpush.bf16.msra.mxu0 0
      %426 = vmatpush.bf16.msra.mxu0 0
      %427 = vmatpush.bf16.msra.mxu0 0
      %428 = vmatpush.bf16.msra.mxu0 %v343
      %429 = vmatpush.bf16.msra.mxu0 %v339
      %430 = vmatpush.bf16.msra.mxu0 %v335
      %431 = vmatpush.bf16.msra.mxu0 %v331
      %432 = vmatmul.bf16.gmra.mxu0 %v381
      %v433 = vpop.f32.mrf.mxu0
      %v434 = vadd.f32 %v352, %v433
      %v435 = vpop.f32.mrf.mxu0
      %v436 = vadd.f32 %v357, %v435
      %437 = vmatmul.bf16.gmra.mxu0 %v384
      %v438 = vpop.f32.mrf.mxu0
      %v439 = vadd.f32 %v362, %v438
      %v440 = vpop.f32.mrf.mxu0
      %v441 = vadd.f32 %v367, %v440
      %442 = vdwg.mxu0
      %443 = vmatpush.bf16.msra.mxu0 0
      %444 = vmatpush.bf16.msra.mxu0 0
      %445 = vmatpush.bf16.msra.mxu0 0
      %446 = vmatpush.bf16.msra.mxu0 0
      %447 = vmatpush.bf16.msra.mxu0 %v344
      %448 = vmatpush.bf16.msra.mxu0 %v340
      %449 = vmatpush.bf16.msra.mxu0 %v336
      %450 = vmatpush.bf16.msra.mxu0 %v332
      %451 = vmatmul.bf16.gmra.mxu0 %v381
      %v452 = vpop.f32.mrf.mxu0
      %v453 = vadd.f32 %v352, %v452
      %v454 = vpop.f32.mrf.mxu0
      %v455 = vadd.f32 %v357, %v454
      %456 = vmatmul.bf16.gmra.mxu0 %v384
      %v457 = vpop.f32.mrf.mxu0
      %v458 = vadd.f32 %v362, %v457
      %v459 = vpop.f32.mrf.mxu0
      %v460 = vadd.f32 %v367, %v459
      %461 = vdwg.mxu0
      %v462 = vtanh.pop %v396
      %v463 = vtanh.pop %v415
      %v464 = vtanh.pop %v434
      %v465 = vtanh.pop %v453
      %v466 = vtanh.pop %v398
      %v467 = vtanh.pop %v417
      %v468 = vtanh.pop %v436
      %v469 = vtanh.pop %v455
      %v470 = vtanh.pop %v401
      %v471 = vtanh.pop %v420
      %v472 = vtanh.pop %v439
      %v473 = vtanh.pop %v458
      %v474 = vtanh.pop %v403
      %v475 = vtanh.pop %v422
      %v476 = vtanh.pop %v441
      %v477 = vtanh.pop %v460
      %v478 = vld [vmem:[%s3] sm:$0xf]
      %v479 = vld [vmem:[%s3 + $0x4] sm:$0xf]
      %v480 = vld [vmem:[%s3 + $0x8] sm:$0xf]
      %v481 = vld [vmem:[%s3 + $0xc] sm:$0xf]
      %v482 = vld [vmem:[%s3 + $0x10] sm:$0xf]
      %v483 = vld [vmem:[%s3 + $0x14] sm:$0xf]
      %v484 = vld [vmem:[%s3 + $0x18] sm:$0xf]
      %v485 = vmul.f32 %v462, %v462
      %v486 = vmul.f32 %v463, %v463
      %v487 = vmul.f32 %v464, %v464
      %v488 = vmul.f32 %v465, %v465
      %v489 = vmul.f32 %v466, %v466
      %v490 = vmul.f32 %v467, %v467
      %v491 = vmul.f32 %v468, %v468
      %v492 = vmul.f32 %v469, %v469
      %v493 = vmul.f32 %v470, %v470
      %v494 = vmul.f32 %v471, %v471
      %v495 = vmul.f32 %v472, %v472
      %v496 = vmul.f32 %v473, %v473
      %v497 = vmul.f32 %v474, %v474
      %v498 = vmul.f32 %v475, %v475
      %v499 = vmul.f32 %v476, %v476
      %v500 = vmul.f32 %v477, %v477
      %v501 = vpack.c.bf16 %v466, %v462
      %v502 = vpack.c.bf16 %v467, %v463
      %v503 = vpack.c.bf16 %v468, %v464
      %v504 = vpack.c.bf16 %v469, %v465
      %v505 = vpack.c.bf16 %v474, %v470
      %v506 = vpack.c.bf16 %v475, %v471
      %v507 = vpack.c.bf16 %v476, %v472
      %v508 = vpack.c.bf16 %v477, %v473
      %v509 = vpack.c.bf16 %v489, %v485
      %v510 = vpack.c.bf16 %v490, %v486
      %v511 = vpack.c.bf16 %v491, %v487
      %v512 = vpack.c.bf16 %v492, %v488
      %v513 = vpack.c.bf16 %v497, %v493
      %v514 = vpack.c.bf16 %v498, %v494
      %v515 = vpack.c.bf16 %v499, %v495
      %v516 = vpack.c.bf16 %v500, %v496
      %v517 = vld [vmem:[%s4] sm:$0xff]
      %v518 = vld [vmem:[%s4 + $0x8] sm:$0xff]
      %v519 = vld [vmem:[%s4 + $0x10] sm:$0xff]
      %v520 = vld [vmem:[%s4 + $0x18] sm:$0xff]
      %v521 = vld [vmem:[%s4 + $0x20] sm:$0xff]
      %v522 = vld [vmem:[%s4 + $0x28] sm:$0xff]
      %v523 = vld [vmem:[%s4 + $0x30] sm:$0xff]
      %525 = vset.pattern.permute.xlu0 0
      %526 = vperm.xlu0 %525, %v517
      %v527 = vpop.permute.xlu0 %526
      %530 = vset.pattern.permute.xlu0 0
      %531 = vperm.xlu0 %530, %v518
      %v532 = vpop.permute.xlu0 %531
      %535 = vset.pattern.permute.xlu0 0
      %536 = vperm.xlu0 %535, %v519
      %v537 = vpop.permute.xlu0 %536
      %540 = vset.pattern.permute.xlu0 0
      %541 = vperm.xlu0 %540, %v520
      %v542 = vpop.permute.xlu0 %541
      %545 = vset.pattern.permute.xlu0 0
      %546 = vperm.xlu0 %545, %v521
      %v547 = vpop.permute.xlu0 %546
      %550 = vset.pattern.permute.xlu0 0
      %551 = vperm.xlu0 %550, %v522
      %v552 = vpop.permute.xlu0 %551
      %555 = vset.pattern.permute.xlu0 0
      %556 = vperm.xlu0 %555, %v523
      %v557 = vpop.permute.xlu0 %556
      %v566 = vunpack.c.l.b16 %v478
      %v567 = vunpack.c.l.b16 %v479
      %v568 = vunpack.c.l.b16 %v480
      %v569 = vunpack.c.l.b16 %v481
      %v570 = vunpack.c.l.b16 %v482
      %v571 = vunpack.c.l.b16 %v483
      %v572 = vunpack.c.l.b16 %v484
      %v573 = vpack.c.b16 %v567, %v566
      %v574 = vpack.c.b16 %v569, %v568
      %v575 = vpack.c.b16 %v571, %v570
      %v576 = vpack.c.b16 %v572, %v572
      %v578 = vsel %vm379, %v573, 0
      %v581 = vsel %vm379, %v574, 0
      %v584 = vsel %vm379, %v575, 0
      %v587 = vsel %vm379, %v576, 0
      %589 = vmatpush.bf16.msra.mxu0 0
      %590 = vmatpush.bf16.msra.mxu0 0
      %591 = vmatpush.bf16.msra.mxu0 0
      %592 = vmatpush.bf16.msra.mxu0 0
      %593 = vmatpush.bf16.msra.mxu0 %v513
      %594 = vmatpush.bf16.msra.mxu0 %v509
      %595 = vmatpush.bf16.msra.mxu0 %v505
      %596 = vmatpush.bf16.msra.mxu0 %v501
      %597 = vmatmul.bf16.gmra.mxu0 %v578
      %v598 = vpop.f32.mrf.mxu0
      %v599 = vadd.f32 %v527, %v598
      %v600 = vpop.f32.mrf.mxu0
      %v601 = vadd.f32 %v532, %v600
      %602 = vmatmul.bf16.gmra.mxu0 %v581
      %v603 = vpop.f32.mrf.mxu0
      %v604 = vadd.f32 %v537, %v603
      %v605 = vpop.f32.mrf.mxu0
      %v606 = vadd.f32 %v542, %v605
      %607 = vmatmul.bf16.gmra.mxu0 %v584
      %v608 = vpop.f32.mrf.mxu0
      %v609 = vadd.f32 %v547, %v608
      %v610 = vpop.f32.mrf.mxu0
      %v611 = vadd.f32 %v552, %v610
      %612 = vmatmul.bf16.gmra.mxu0 %v587
      %v613 = vpop.f32.mrf.mxu0
      %v614 = vadd.f32 %v557, %v613
      %v615 = vpop.f32.mrf.mxu0
      %616 = vdwg.mxu0
      %617 = vmatpush.bf16.msra.mxu0 0
      %618 = vmatpush.bf16.msra.mxu0 0
      %619 = vmatpush.bf16.msra.mxu0 0
      %620 = vmatpush.bf16.msra.mxu0 0
      %621 = vmatpush.bf16.msra.mxu0 %v514
      %622 = vmatpush.bf16.msra.mxu0 %v510
      %623 = vmatpush.bf16.msra.mxu0 %v506
      %624 = vmatpush.bf16.msra.mxu0 %v502
      %625 = vmatmul.bf16.gmra.mxu0 %v578
      %v626 = vpop.f32.mrf.mxu0
      %v627 = vadd.f32 %v527, %v626
      %v628 = vpop.f32.mrf.mxu0
      %v629 = vadd.f32 %v532, %v628
      %630 = vmatmul.bf16.gmra.mxu0 %v581
      %v631 = vpop.f32.mrf.mxu0
      %v632 = vadd.f32 %v537, %v631
      %v633 = vpop.f32.mrf.mxu0
      %v634 = vadd.f32 %v542, %v633
      %635 = vmatmul.bf16.gmra.mxu0 %v584
      %v636 = vpop.f32.mrf.mxu0
      %v637 = vadd.f32 %v547, %v636
      %v638 = vpop.f32.mrf.mxu0
      %v639 = vadd.f32 %v552, %v638
      %640 = vmatmul.bf16.gmra.mxu0 %v587
      %v641 = vpop.f32.mrf.mxu0
      %v642 = vadd.f32 %v557, %v641
      %v643 = vpop.f32.mrf.mxu0
      %644 = vdwg.mxu0
      %645 = vmatpush.bf16.msra.mxu0 0
      %646 = vmatpush.bf16.msra.mxu0 0
      %647 = vmatpush.bf16.msra.mxu0 0
      %648 = vmatpush.bf16.msra.mxu0 0
      %649 = vmatpush.bf16.msra.mxu0 %v515
      %650 = vmatpush.bf16.msra.mxu0 %v511
      %651 = vmatpush.bf16.msra.mxu0 %v507
      %652 = vmatpush.bf16.msra.mxu0 %v503
      %653 = vmatmul.bf16.gmra.mxu0 %v578
      %v654 = vpop.f32.mrf.mxu0
      %v655 = vadd.f32 %v527, %v654
      %v656 = vpop.f32.mrf.mxu0
      %v657 = vadd.f32 %v532, %v656
      %658 = vmatmul.bf16.gmra.mxu0 %v581
      %v659 = vpop.f32.mrf.mxu0
      %v660 = vadd.f32 %v537, %v659
      %v661 = vpop.f32.mrf.mxu0
      %v662 = vadd.f32 %v542, %v661
      %663 = vmatmul.bf16.gmra.mxu0 %v584
      %v664 = vpop.f32.mrf.mxu0
      %v665 = vadd.f32 %v547, %v664
      %v666 = vpop.f32.mrf.mxu0
      %v667 = vadd.f32 %v552, %v666
      %668 = vmatmul.bf16.gmra.mxu0 %v587
      %v669 = vpop.f32.mrf.mxu0
      %v670 = vadd.f32 %v557, %v669
      %v671 = vpop.f32.mrf.mxu0
      %672 = vdwg.mxu0
      %673 = vmatpush.bf16.msra.mxu0 0
      %674 = vmatpush.bf16.msra.mxu0 0
      %675 = vmatpush.bf16.msra.mxu0 0
      %676 = vmatpush.bf16.msra.mxu0 0
      %677 = vmatpush.bf16.msra.mxu0 %v516
      %678 = vmatpush.bf16.msra.mxu0 %v512
      %679 = vmatpush.bf16.msra.mxu0 %v508
      %680 = vmatpush.bf16.msra.mxu0 %v504
      %681 = vmatmul.bf16.gmra.mxu0 %v578
      %v682 = vpop.f32.mrf.mxu0
      %v683 = vadd.f32 %v527, %v682
      %v684 = vpop.f32.mrf.mxu0
      %v685 = vadd.f32 %v532, %v684
      %686 = vmatmul.bf16.gmra.mxu0 %v581
      %v687 = vpop.f32.mrf.mxu0
      %v688 = vadd.f32 %v537, %v687
      %v689 = vpop.f32.mrf.mxu0
      %v690 = vadd.f32 %v542, %v689
      %691 = vmatmul.bf16.gmra.mxu0 %v584
      %v692 = vpop.f32.mrf.mxu0
      %v693 = vadd.f32 %v547, %v692
      %v694 = vpop.f32.mrf.mxu0
      %v695 = vadd.f32 %v552, %v694
      %696 = vmatmul.bf16.gmra.mxu0 %v587
      %v697 = vpop.f32.mrf.mxu0
      %v698 = vadd.f32 %v557, %v697
      %v699 = vpop.f32.mrf.mxu0
      %700 = vdwg.mxu0
      %701 = vst [vmem:[%s282] sm:$0xff] %v599
      %702 = vst [vmem:[%s282 + $0x8] sm:$0xff] %v627
      %703 = vst [vmem:[%s282 + $0x10] sm:$0xff] %v655
      %704 = vst [vmem:[%s282 + $0x18] sm:$0xff] %v683
      %705 = vst [vmem:[%s282 + $0x20] sm:$0xff] %v601
      %706 = vst [vmem:[%s282 + $0x28] sm:$0xff] %v629
      %707 = vst [vmem:[%s282 + $0x30] sm:$0xff] %v657
      %708 = vst [vmem:[%s282 + $0x38] sm:$0xff] %v685
      %709 = vst [vmem:[%s282 + $0x40] sm:$0xff] %v604
      %710 = vst [vmem:[%s282 + $0x48] sm:$0xff] %v632
      %711 = vst [vmem:[%s282 + $0x50] sm:$0xff] %v660
      %712 = vst [vmem:[%s282 + $0x58] sm:$0xff] %v688
      %713 = vst [vmem:[%s282 + $0x60] sm:$0xff] %v606
      %714 = vst [vmem:[%s282 + $0x68] sm:$0xff] %v634
      %715 = vst [vmem:[%s282 + $0x70] sm:$0xff] %v662
      %716 = vst [vmem:[%s282 + $0x78] sm:$0xff] %v690
      %717 = vst [vmem:[%s282 + $0x80] sm:$0xff] %v609
      %718 = vst [vmem:[%s282 + $0x88] sm:$0xff] %v637
      %719 = vst [vmem:[%s282 + $0x90] sm:$0xff] %v665
      %720 = vst [vmem:[%s282 + $0x98] sm:$0xff] %v693
      %721 = vst [vmem:[%s282 + $0xa0] sm:$0xff] %v611
      %722 = vst [vmem:[%s282 + $0xa8] sm:$0xff] %v639
      %723 = vst [vmem:[%s282 + $0xb0] sm:$0xff] %v667
      %724 = vst [vmem:[%s282 + $0xb8] sm:$0xff] %v695
      %725 = vst [vmem:[%s282 + $0xc0] sm:$0xff] %v614
      %726 = vst [vmem:[%s282 + $0xc8] sm:$0xff] %v642
      %727 = vst [vmem:[%s282 + $0xd0] sm:$0xff] %v670
      %728 = vst [vmem:[%s282 + $0xd8] sm:$0xff] %v698
      %s729 = smul.u32 4, %s21
      %p730 = scmp.lt.s32.totalorder %s20, 1
      %s731 = scalar_select %p730, %s20, 1
      %p732 = scmp.lt.s32.totalorder %s729, 3
      %s733 = scalar_select %p732, %s729, 3
      %s734 = smul.addr %s731, 28
      %s735 = sadd.s32 %s733, %s734
      %s736 = smul.addr %s735, 8
      %s737 = scalar_lea.vmem %s5, %s736
      // Predicated region
      $region41: #{pointnet_kan_forward.3} parent=39 // pred_check
        %p738 = pneg %p165
      $region42: #{pointnet_kan_forward.3} parent=39 // pred_check_branch
        %740 = sbr.rel (%p738) target = $region44
      $region43: #{pointnet_kan_forward.3} parent=39 // pred_region
        %s741 = smul.u32 4, %s21
      $region44: #{pointnet_kan_forward.3} parent=39 // pred_fallthru
        _
    $region40: #{pointnet_kan_forward.3} parent=5 // pred_fallthru
      _
    %p742 = scmp.le.s32.totalorder 2, %s11
    // Predicated region
    $region45: #{pointnet_kan_forward.3} parent=5 // pred_check
      %p743 = pneg %p742
    $region46: #{pointnet_kan_forward.3} parent=5 // pred_check_branch
      %745 = sbr.rel (%p743) target = $region48
    $region47: #{pointnet_kan_forward.3} parent=5 // pred_region
      %s746 = ssub.s32 %s11, 2
      // Predicated region
      $region49: #{pointnet_kan_forward.3} parent=47 // pred_check
        %p747 = pneg %p171
      $region50: #{pointnet_kan_forward.3} parent=47 // pred_check_branch
        %749 = sbr.rel (%p747) target = $region52
      $region51: #{pointnet_kan_forward.3} parent=47 // pred_region
        %s750 = smul.u32 4, %s23
        %p751 = scmp.lt.s32.totalorder %s22, 1
        %s752 = scalar_select %p751, %s22, 1
        %p753 = scmp.lt.s32.totalorder %s750, 3
        %s754 = scalar_select %p753, %s750, 3
        %s755 = smul.addr %s752, 28
        %s756 = sadd.s32 %s754, %s755
        %s757 = smul.addr %s756, 8
        %s758 = scalar_lea.vmem %s5, %s757
      $region52: #{pointnet_kan_forward.3} parent=47 // pred_fallthru
        _
    $region48: #{pointnet_kan_forward.3} parent=5 // pred_fallthru
      _
  $region6: #{pointnet_kan_forward.3} parent=0 // loop_footer
    %s15 = sadd.s32 1, %s11
  $region7: #{pointnet_kan_forward.3} parent=0 // loop_footer_branch
    %10 = sbr.rel target = $region3
  $region8: #{pointnet_kan_forward.3} parent=0 // loop_exit
    _

</llo_original>
